<compile_context>
chip_gen: v5e
topology: v5e:2x2
jax: 0.10.0
libtpu: 0.0.40
codegen_flags: <defaults>
</compile_context>

<pallas_src>
import functools

import jax
import jax.numpy as jnp
from jax import lax
from jax.experimental import pallas as pl
from jax.experimental.pallas import tpu as pltpu

EPS = 1e-5
W3_LANE_PAD = 128  # out-projection weight padded to a full lane tile for the MXU


def _round_up(x, m):
    return (x + m - 1) // m * m


def _make_kernel(tile, n_actual, n_padded):
    """Builds the kernel body for a given (static) tiling."""
    need_mask = (n_actual != n_padded)
    inv_n = 1.0 / float(n_actual)

    def kernel(x_ref,
               w1_ref, b1_ref, g1_ref, be1_ref,
               w2_ref, b2_ref, g2_ref, be2_ref,
               w3_ref, b3_ref,
               o_ref,
               s1a, s1b, s2a, s2b):
        # grid = (pass, batch_tile); pass 0: BN1 stats, 1: BN2 stats, 2: output
        p = pl.program_id(0)
        t = pl.program_id(1)
        last_t = pl.num_programs(1) - 1

        # ---- fc1 as VPU broadcast FMAs (degenerate K=2; skip the MXU) ----
        x = x_ref[...]                                       # [tile, 2]   f32
        w1 = w1_ref[...]                                     # [2, 256]    f32
        h1 = x[:, 0:1] * w1[0:1, :] + x[:, 1:2] * w1[1:2, :] + b1_ref[...]
        h1 = jnp.maximum(h1, 0.0)                            # [tile, 256] f32

        if need_mask:
            row = lax.broadcasted_iota(jnp.int32, (tile, 1), 0) + t * tile
            valid = (row < n_actual).astype(jnp.float32)     # [tile, 1]
        else:
            valid = None

        # ---------------- pass 0: BN1 batch statistics ----------------
        @pl.when(jnp.logical_and(p == 0, t == 0))
        def _init():
            s1a[...] = jnp.zeros_like(s1a)
            s1b[...] = jnp.zeros_like(s1b)
            s2a[...] = jnp.zeros_like(s2a)
            s2b[...] = jnp.zeros_like(s2b)

        @pl.when(p == 0)
        def _bn1_stats():
            h = h1 * valid if need_mask else h1
            s1a[...] += jnp.sum(h, axis=0, keepdims=True)
            s1b[...] += jnp.sum(h * h, axis=0, keepdims=True)

        @pl.when(jnp.logical_and(p == 0, t == last_t))
        def _bn1_finalize():
            mean = s1a[...] * inv_n
            var = jnp.maximum(s1b[...] * inv_n - mean * mean, 0.0)
            scale = g1_ref[...] * lax.rsqrt(var + EPS)
            s1a[...] = scale                          # scratch now holds scale
            s1b[...] = be1_ref[...] - mean * scale    # scratch now holds shift

        def fc2(h):
            # BN1 (fused scale/shift) + fc2 + ReLU; bf16 MXU operands, f32 acc.
            hn = h * s1a[...] + s1b[...]
            y = jnp.dot(hn.astype(jnp.bfloat16), w2_ref[...],
                        preferred_element_type=jnp.float32) + b2_ref[...]
            return jnp.maximum(y, 0.0)                # [tile, 256] f32

        # ---------------- pass 1: BN2 batch statistics ----------------
        @pl.when(p == 1)
        def _bn2_stats():
            h2 = fc2(h1)
            h = h2 * valid if need_mask else h2
            s2a[...] += jnp.sum(h, axis=0, keepdims=True)
            s2b[...] += jnp.sum(h * h, axis=0, keepdims=True)

        @pl.when(jnp.logical_and(p == 1, t == last_t))
        def _bn2_finalize():
            mean = s2a[...] * inv_n
            var = jnp.maximum(s2b[...] * inv_n - mean * mean, 0.0)
            scale = g2_ref[...] * lax.rsqrt(var + EPS)
            s2a[...] = scale
            s2b[...] = be2_ref[...] - mean * scale

        # ------------- pass 2: apply BN2 + output projection -------------
        @pl.when(p == 2)
        def _emit():
            h2 = fc2(h1)                              # recompute (beats an HBM trip)
            h2n = h2 * s2a[...] + s2b[...]
            y = jnp.dot(h2n.astype(jnp.bfloat16), w3_ref[...],
                        preferred_element_type=jnp.float32)   # [tile, 128]
            o_ref[...] = y[:, :3] + b3_ref[...]
        # Passes 0/1 never write o_ref; their (stale) buffer contents are
        # written back to HBM but are overwritten by pass 2 (the grid is
        # sequential), so the final result is correct.

    return kernel


def _replicated(shape):
    """Whole-array block, same block for every grid step (weights / BN params)."""
    zeros = (0,) * len(shape)
    return pl.BlockSpec(shape, lambda p, t, _z=zeros: _z)


def prepare_params(params):
    """One-time weight preprocessing, hoisted out of the per-forward path:
    bf16 casts for the MXU operands and lane-padding of the out projection."""
    p = dict(params)
    p["w2"] = params["w2"].astype(jnp.bfloat16)
    w3 = params["w3"]
    p["w3"] = jnp.pad(w3, ((0, 0), (0, W3_LANE_PAD - w3.shape[1]))
                      ).astype(jnp.bfloat16)
    return p


def mlp_forward(x, params, *, batch_tile=512):
    """x: [N, 2] f32 -> [N, 3] f32.  Train-mode BatchNorm (batch statistics)."""
    n, f_in = x.shape
    assert f_in == 2

    tile = min(batch_tile, _round_up(n, 8))
    assert tile % 8 == 0, "batch tile must be a multiple of 8 (f32 sublanes)"
    n_padded = _round_up(n, tile)
    n_tiles = n_padded // tile
    if n_padded != n:
        # Padded rows are masked out of the BN statistics inside the kernel.
        x = jnp.pad(x, ((0, n_padded - n), (0, 0)))

    # Trace-time-only checks: no per-call ops when params are already prepared.
    w2 = params["w2"]
    if w2.dtype != jnp.bfloat16:
        w2 = w2.astype(jnp.bfloat16)
    w3 = params["w3"]
    if w3.shape[1] != W3_LANE_PAD:
        w3 = jnp.pad(w3, ((0, 0), (0, W3_LANE_PAD - w3.shape[1])))
    if w3.dtype != jnp.bfloat16:
        w3 = w3.astype(jnp.bfloat16)

    args = (x,
            params["w1"], params["b1"], params["g1"], params["be1"],
            w2, params["b2"], params["g2"], params["be2"],
            w3, params["b3"])

    in_specs = [pl.BlockSpec((tile, 2), lambda p, t: (t, 0))]
    in_specs += [_replicated(a.shape) for a in args[1:]]
    out_spec = pl.BlockSpec((tile, 3), lambda p, t: (t, 0))

    kernel = _make_kernel(tile, n, n_padded)

    # Both grid axes must stay "arbitrary": the batch-tile axis carries the
    # cross-tile BN statistic accumulation in VMEM scratch, and the pass axis
    # is a strict dependency chain.
    # TODO(synk): on v7x (2 TCs), shard the batch-tile axis across cores and
    # combine per-core partial BN sums (CMEM / cross-core DMA) before finalize.
    # TODO(synk): for the repeated tiny-N latency regime, keep w2/w3 resident
    # in VMEM across calls (cross-call prefetch) instead of re-DMAing them.
    out = pl.pallas_call(
        kernel,
        out_shape=jax.ShapeDtypeStruct((n_padded, 3), jnp.float32),
        grid=(3, n_tiles),
        in_specs=in_specs,
        out_specs=out_spec,
        scratch_shapes=[pltpu.VMEM((1, 256), jnp.float32)] * 4,
        compiler_params=pltpu.CompilerParams(
            dimension_semantics=("arbitrary", "arbitrary")),
    )(*args)

    return out[:n] if n_padded != n else out


def init_params(key):
    """Deterministic parameter init (shapes match the PyTorch module)."""
    ks = jax.random.split(key, 6)
    # weights stored as [in, out] (transposed vs torch's [out, in])
    w1 = jax.random.normal(ks[0], (2, 256), jnp.float32) * 0.1
    b1 = jax.random.normal(ks[1], (1, 256), jnp.float32) * 0.1
    w2 = jax.random.normal(ks[2], (256, 256), jnp.float32) * 0.05
    b2 = jax.random.normal(ks[3], (1, 256), jnp.float32) * 0.1
    w3 = jax.random.normal(ks[4], (256, 3), jnp.float32) * 0.1
    b3 = jax.random.normal(ks[5], (1, 3), jnp.float32) * 0.1
    # BatchNorm affine params: PyTorch default init (weight=1, bias=0)
    g1 = jnp.ones((1, 256), jnp.float32)
    be1 = jnp.zeros((1, 256), jnp.float32)
    g2 = jnp.ones((1, 256), jnp.float32)
    be2 = jnp.zeros((1, 256), jnp.float32)
    return dict(w1=w1, b1=b1, g1=g1, be1=be1,
                w2=w2, b2=b2, g2=g2, be2=be2,
                w3=w3, b3=b3)


def mlp_reference_f32(x, p):
    """Pure-JAX f32 reference of the PyTorch module forward (train-mode BN)."""
    def bn(h, g, b):
        m = jnp.mean(h, axis=0, keepdims=True)
        v = jnp.mean((h - m) ** 2, axis=0, keepdims=True)
        return (h - m) * lax.rsqrt(v + EPS) * g + b
    h = jnp.maximum(x @ p["w1"] + p["b1"], 0.0)
    h = bn(h, p["g1"], p["be1"])
    h = jnp.maximum(h @ p["w2"] + p["b2"], 0.0)
    h = bn(h, p["g2"], p["be2"])
    return h @ p["w3"] + p["b3"]


def mlp_reference_matched(x, p):
    """Pure-JAX reference with the kernel's op ordering / mixed precision."""
    w2b = p["w2"].astype(jnp.bfloat16)
    w3b = p["w3"].astype(jnp.bfloat16)

    def bn(h, g, b):
        m = jnp.mean(h, axis=0, keepdims=True)
        v = jnp.maximum(jnp.mean(h * h, axis=0, keepdims=True) - m * m, 0.0)
        s = g * lax.rsqrt(v + EPS)
        return h * s + (b - m * s)

    w1 = p["w1"]
    h1 = x[:, 0:1] * w1[0:1, :] + x[:, 1:2] * w1[1:2, :] + p["b1"]
    h1 = jnp.maximum(h1, 0.0)
    h1 = bn(h1, p["g1"], p["be1"])
    h2 = jnp.dot(h1.astype(jnp.bfloat16), w2b,
                 preferred_element_type=jnp.float32) + p["b2"]
    h2 = jnp.maximum(h2, 0.0)
    h2 = bn(h2, p["g2"], p["be2"])
    return jnp.dot(h2.astype(jnp.bfloat16), w3b,
                   preferred_element_type=jnp.float32) + p["b3"]


if __name__ == "__main__":
    key = jax.random.PRNGKey(0)
    kx, kp = jax.random.split(key)

    # Small demo shapes consistent with the module (input feature dim = 2).
    # N=44 with batch_tile=16 exercises multi-tile BN statistics and the
    # ragged-batch masking path (44 rows padded to 48).
    N = 44
    x = jax.random.normal(kx, (N, 2), jnp.float32)

    params = init_params(kp)            # f32 master params (PyTorch semantics)
    kparams = prepare_params(params)    # one-time bf16 cast / pad, not per-call

    fwd = jax.jit(functools.partial(mlp_forward, batch_tile=16))
    out = jax.block_until_ready(fwd(x, kparams))
    assert out.shape == (N, 3)

    # Tight-ish check vs a reference with the kernel's mixed-precision math.
    ref_tight = mlp_reference_matched(x, params)
    assert jnp.allclose(out, ref_tight, atol=2e-2, rtol=2e-2), (
        "mismatch vs matched-precision reference: max abs diff "
        f"{jnp.max(jnp.abs(out - ref_tight)):.3e}")

    # Looser check vs the full-f32 PyTorch-semantics reference (difference is
    # only the bf16 MXU operands of fc2 / out).
    ref_f32 = mlp_reference_f32(x, params)
    assert jnp.allclose(out, ref_f32, atol=8e-2, rtol=8e-2), (
        "mismatch vs f32 reference: max abs diff "
        f"{jnp.max(jnp.abs(out - ref_f32)):.3e}")

    print("KERNEL_OK")
</pallas_src>

<mosaic_0001>
module attributes {stable_mosaic.version = 11 : i64} {
  func.func @kernel(%arg0: i32, %arg1: i32, %arg2: memref<16x2xf32, #tpu.memory_space<vmem>>, %arg3: memref<2x256xf32, #tpu.memory_space<vmem>>, %arg4: memref<1x256xf32, #tpu.memory_space<vmem>>, %arg5: memref<1x256xf32, #tpu.memory_space<vmem>>, %arg6: memref<1x256xf32, #tpu.memory_space<vmem>>, %arg7: memref<256x256xbf16, #tpu.memory_space<vmem>>, %arg8: memref<1x256xf32, #tpu.memory_space<vmem>>, %arg9: memref<1x256xf32, #tpu.memory_space<vmem>>, %arg10: memref<1x256xf32, #tpu.memory_space<vmem>>, %arg11: memref<256x128xbf16, #tpu.memory_space<vmem>>, %arg12: memref<1x3xf32, #tpu.memory_space<vmem>>, %arg13: memref<16x3xf32, #tpu.memory_space<vmem>>, %arg14: memref<1x256xf32, #tpu.memory_space<vmem>>, %arg15: memref<1x256xf32, #tpu.memory_space<vmem>>, %arg16: memref<1x256xf32, #tpu.memory_space<vmem>>, %arg17: memref<1x256xf32, #tpu.memory_space<vmem>>) attributes {dimension_semantics = [#tpu.dimension_semantics<arbitrary>, #tpu.dimension_semantics<arbitrary>], iteration_bounds = array<i64: 3, 3>, scalar_prefetch = 0 : i64, scratch_operands = 4 : i64, tpu.core_type = #tpu.core_type<tc>, window_params = [{transform_indices = @transform_0, window_bounds = array<i64: 16, 2>}, {pipeline_mode = #tpu.pipeline_mode<synchronous>, transform_indices = @transform_1, window_bounds = array<i64: 2, 256>}, {pipeline_mode = #tpu.pipeline_mode<synchronous>, transform_indices = @transform_2, window_bounds = array<i64: 1, 256>}, {pipeline_mode = #tpu.pipeline_mode<synchronous>, transform_indices = @transform_3, window_bounds = array<i64: 1, 256>}, {pipeline_mode = #tpu.pipeline_mode<synchronous>, transform_indices = @transform_4, window_bounds = array<i64: 1, 256>}, {pipeline_mode = #tpu.pipeline_mode<synchronous>, transform_indices = @transform_5, window_bounds = array<i64: 256, 256>}, {pipeline_mode = #tpu.pipeline_mode<synchronous>, transform_indices = @transform_6, window_bounds = array<i64: 1, 256>}, {pipeline_mode = #tpu.pipeline_mode<synchronous>, transform_indices = @transform_7, window_bounds = array<i64: 1, 256>}, {pipeline_mode = #tpu.pipeline_mode<synchronous>, transform_indices = @transform_8, window_bounds = array<i64: 1, 256>}, {pipeline_mode = #tpu.pipeline_mode<synchronous>, transform_indices = @transform_9, window_bounds = array<i64: 256, 128>}, {pipeline_mode = #tpu.pipeline_mode<synchronous>, transform_indices = @transform_10, window_bounds = array<i64: 1, 3>}, {transform_indices = @transform_11, window_bounds = array<i64: 16, 3>}]} {
    %c0 = arith.constant 0 : index
    %c0_0 = arith.constant 0 : index
    %0 = vector.load %arg2[%c0, %c0_0] : memref<16x2xf32, #tpu.memory_space<vmem>>, vector<16x2xf32>
    %c0_1 = arith.constant 0 : index
    %c0_2 = arith.constant 0 : index
    %1 = vector.load %arg3[%c0_1, %c0_2] : memref<2x256xf32, #tpu.memory_space<vmem>>, vector<2x256xf32>
    %2 = vector.extract_strided_slice %0 {offsets = [0, 0], sizes = [16, 1], strides = [1, 1]} : vector<16x2xf32> to vector<16x1xf32>
    %3 = vector.extract_strided_slice %1 {offsets = [0, 0], sizes = [1, 256], strides = [1, 1]} : vector<2x256xf32> to vector<1x256xf32>
    %4 = vector.broadcast %2 : vector<16x1xf32> to vector<16x256xf32>
    %5 = vector.broadcast %3 : vector<1x256xf32> to vector<16x256xf32>
    %6 = arith.mulf %4, %5 : vector<16x256xf32>
    %7 = vector.extract_strided_slice %0 {offsets = [0, 1], sizes = [16, 1], strides = [1, 1]} : vector<16x2xf32> to vector<16x1xf32>
    %8 = vector.extract_strided_slice %1 {offsets = [1, 0], sizes = [1, 256], strides = [1, 1]} : vector<2x256xf32> to vector<1x256xf32>
    %9 = vector.broadcast %7 : vector<16x1xf32> to vector<16x256xf32>
    %10 = vector.broadcast %8 : vector<1x256xf32> to vector<16x256xf32>
    %11 = arith.mulf %9, %10 : vector<16x256xf32>
    %12 = arith.addf %6, %11 : vector<16x256xf32>
    %c0_3 = arith.constant 0 : index
    %c0_4 = arith.constant 0 : index
    %13 = vector.load %arg4[%c0_3, %c0_4] : memref<1x256xf32, #tpu.memory_space<vmem>>, vector<1x256xf32>
    %14 = vector.broadcast %13 : vector<1x256xf32> to vector<16x256xf32>
    %15 = arith.addf %12, %14 : vector<16x256xf32>
    %cst = arith.constant 0.000000e+00 : f32
    %16 = vector.broadcast %cst : f32 to vector<16x256xf32>
    %17 = arith.maximumf %15, %16 : vector<16x256xf32>
    %18 = tpu.iota {dimensions = array<i32: 0>} : vector<16x1xi32>
    %c16_i32 = arith.constant 16 : i32
    %19 = arith.muli %arg1, %c16_i32 : i32
    %20 = vector.broadcast %19 : i32 to vector<16x1xi32>
    %21 = arith.addi %18, %20 : vector<16x1xi32>
    %c44_i32 = arith.constant 44 : i32
    %22 = vector.broadcast %c44_i32 : i32 to vector<16x1xi32>
    %23 = arith.cmpi slt, %21, %22 : vector<16x1xi32>
    %24 = arith.extui %23 : vector<16x1xi1> to vector<16x1xi32>
    %25 = arith.sitofp %24 : vector<16x1xi32> to vector<16x1xf32>
    %c0_i32 = arith.constant 0 : i32
    %26 = arith.cmpi eq, %arg0, %c0_i32 : i32
    %c0_i32_5 = arith.constant 0 : i32
    %27 = arith.cmpi eq, %arg1, %c0_i32_5 : i32
    %28 = arith.andi %26, %27 : i1
    %29 = arith.extui %28 : i1 to i32
    %c0_i32_6 = arith.constant 0 : i32
    %30 = arith.cmpi ne, %29, %c0_i32_6 : i32
    scf.if %30 {
      %cst_17 = arith.constant 0.000000e+00 : f32
      %50 = vector.broadcast %cst_17 : f32 to vector<1x256xf32>
      %c0_18 = arith.constant 0 : index
      %c0_19 = arith.constant 0 : index
      %51 = vector.load %arg14[%c0_18, %c0_19] : memref<1x256xf32, #tpu.memory_space<vmem>>, vector<1x256xf32>
      tpu.vector_store %arg14[%c0_18, %c0_19], %50 {strides = array<i32>} : memref<1x256xf32, #tpu.memory_space<vmem>>, vector<1x256xf32>,
      %cst_20 = arith.constant 0.000000e+00 : f32
      %52 = vector.broadcast %cst_20 : f32 to vector<1x256xf32>
      %c0_21 = arith.constant 0 : index
      %c0_22 = arith.constant 0 : index
      %53 = vector.load %arg15[%c0_21, %c0_22] : memref<1x256xf32, #tpu.memory_space<vmem>>, vector<1x256xf32>
      tpu.vector_store %arg15[%c0_21, %c0_22], %52 {strides = array<i32>} : memref<1x256xf32, #tpu.memory_space<vmem>>, vector<1x256xf32>,
      %cst_23 = arith.constant 0.000000e+00 : f32
      %54 = vector.broadcast %cst_23 : f32 to vector<1x256xf32>
      %c0_24 = arith.constant 0 : index
      %c0_25 = arith.constant 0 : index
      %55 = vector.load %arg16[%c0_24, %c0_25] : memref<1x256xf32, #tpu.memory_space<vmem>>, vector<1x256xf32>
      tpu.vector_store %arg16[%c0_24, %c0_25], %54 {strides = array<i32>} : memref<1x256xf32, #tpu.memory_space<vmem>>, vector<1x256xf32>,
      %cst_26 = arith.constant 0.000000e+00 : f32
      %56 = vector.broadcast %cst_26 : f32 to vector<1x256xf32>
      %c0_27 = arith.constant 0 : index
      %c0_28 = arith.constant 0 : index
      %57 = vector.load %arg17[%c0_27, %c0_28] : memref<1x256xf32, #tpu.memory_space<vmem>>, vector<1x256xf32>
      tpu.vector_store %arg17[%c0_27, %c0_28], %56 {strides = array<i32>} : memref<1x256xf32, #tpu.memory_space<vmem>>, vector<1x256xf32>,
    } else {
    }
    %c0_i32_7 = arith.constant 0 : i32
    %31 = arith.cmpi eq, %arg0, %c0_i32_7 : i32
    %32 = arith.extui %31 : i1 to i32
    %c0_i32_8 = arith.constant 0 : i32
    %33 = arith.cmpi ne, %32, %c0_i32_8 : i32
    scf.if %33 {
      %50 = vector.broadcast %25 : vector<16x1xf32> to vector<16x256xf32>
      %51 = arith.mulf %17, %50 : vector<16x256xf32>
      %c0_17 = arith.constant 0 : index
      %c0_18 = arith.constant 0 : index
      %52 = vector.load %arg14[%c0_17, %c0_18] : memref<1x256xf32, #tpu.memory_space<vmem>>, vector<1x256xf32>
      %cst_19 = arith.constant dense<0.000000e+00> : vector<256xf32>
      %53 = vector.multi_reduction <add>, %51, %cst_19 [0] : vector<16x256xf32> to vector<256xf32>
      %54 = vector.shape_cast %53 : vector<256xf32> to vector<1x256xf32>
      %55 = arith.addf %52, %54 : vector<1x256xf32>
      %c0_20 = arith.constant 0 : index
      %c0_21 = arith.constant 0 : index
      %56 = vector.load %arg14[%c0_20, %c0_21] : memref<1x256xf32, #tpu.memory_space<vmem>>, vector<1x256xf32>
      tpu.vector_store %arg14[%c0_20, %c0_21], %55 {strides = array<i32>} : memref<1x256xf32, #tpu.memory_space<vmem>>, vector<1x256xf32>,
      %c0_22 = arith.constant 0 : index
      %c0_23 = arith.constant 0 : index
      %57 = vector.load %arg15[%c0_22, %c0_23] : memref<1x256xf32, #tpu.memory_space<vmem>>, vector<1x256xf32>
      %58 = arith.mulf %51, %51 : vector<16x256xf32>
      %cst_24 = arith.constant dense<0.000000e+00> : vector<256xf32>
      %59 = vector.multi_reduction <add>, %58, %cst_24 [0] : vector<16x256xf32> to vector<256xf32>
      %60 = vector.shape_cast %59 : vector<256xf32> to vector<1x256xf32>
      %61 = arith.addf %57, %60 : vector<1x256xf32>
      %c0_25 = arith.constant 0 : index
      %c0_26 = arith.constant 0 : index
      %62 = vector.load %arg15[%c0_25, %c0_26] : memref<1x256xf32, #tpu.memory_space<vmem>>, vector<1x256xf32>
      tpu.vector_store %arg15[%c0_25, %c0_26], %61 {strides = array<i32>} : memref<1x256xf32, #tpu.memory_space<vmem>>, vector<1x256xf32>,
    } else {
    }
    %c0_i32_9 = arith.constant 0 : i32
    %34 = arith.cmpi eq, %arg0, %c0_i32_9 : i32
    %c2_i32 = arith.constant 2 : i32
    %35 = arith.cmpi eq, %arg1, %c2_i32 : i32
    %36 = arith.andi %34, %35 : i1
    %37 = arith.extui %36 : i1 to i32
    %c0_i32_10 = arith.constant 0 : i32
    %38 = arith.cmpi ne, %37, %c0_i32_10 : i32
    scf.if %38 {
      %c0_17 = arith.constant 0 : index
      %c0_18 = arith.constant 0 : index
      %50 = vector.load %arg14[%c0_17, %c0_18] : memref<1x256xf32, #tpu.memory_space<vmem>>, vector<1x256xf32>
      %cst_19 = arith.constant 0.0227272734 : f32
      %51 = vector.broadcast %cst_19 : f32 to vector<1x256xf32>
      %52 = arith.mulf %50, %51 : vector<1x256xf32>
      %c0_20 = arith.constant 0 : index
      %c0_21 = arith.constant 0 : index
      %53 = vector.load %arg15[%c0_20, %c0_21] : memref<1x256xf32, #tpu.memory_space<vmem>>, vector<1x256xf32>
      %cst_22 = arith.constant 0.0227272734 : f32
      %54 = vector.broadcast %cst_22 : f32 to vector<1x256xf32>
      %55 = arith.mulf %53, %54 : vector<1x256xf32>
      %56 = arith.mulf %52, %52 : vector<1x256xf32>
      %57 = arith.subf %55, %56 : vector<1x256xf32>
      %cst_23 = arith.constant 0.000000e+00 : f32
      %58 = vector.broadcast %cst_23 : f32 to vector<1x256xf32>
      %59 = arith.maximumf %57, %58 : vector<1x256xf32>
      %c0_24 = arith.constant 0 : index
      %c0_25 = arith.constant 0 : index
      %60 = vector.load %arg5[%c0_24, %c0_25] : memref<1x256xf32, #tpu.memory_space<vmem>>, vector<1x256xf32>
      %cst_26 = arith.constant 9.99999974E-6 : f32
      %61 = vector.broadcast %cst_26 : f32 to vector<1x256xf32>
      %62 = arith.addf %59, %61 : vector<1x256xf32>
      %63 = math.rsqrt %62 : vector<1x256xf32>
      %64 = arith.mulf %60, %63 : vector<1x256xf32>
      %c0_27 = arith.constant 0 : index
      %c0_28 = arith.constant 0 : index
      %65 = vector.load %arg14[%c0_27, %c0_28] : memref<1x256xf32, #tpu.memory_space<vmem>>, vector<1x256xf32>
      tpu.vector_store %arg14[%c0_27, %c0_28], %64 {strides = array<i32>} : memref<1x256xf32, #tpu.memory_space<vmem>>, vector<1x256xf32>,
      %c0_29 = arith.constant 0 : index
      %c0_30 = arith.constant 0 : index
      %66 = vector.load %arg6[%c0_29, %c0_30] : memref<1x256xf32, #tpu.memory_space<vmem>>, vector<1x256xf32>
      %67 = arith.mulf %52, %64 : vector<1x256xf32>
      %68 = arith.subf %66, %67 : vector<1x256xf32>
      %c0_31 = arith.constant 0 : index
      %c0_32 = arith.constant 0 : index
      %69 = vector.load %arg15[%c0_31, %c0_32] : memref<1x256xf32, #tpu.memory_space<vmem>>, vector<1x256xf32>
      tpu.vector_store %arg15[%c0_31, %c0_32], %68 {strides = array<i32>} : memref<1x256xf32, #tpu.memory_space<vmem>>, vector<1x256xf32>,
    } else {
    }
    %c1_i32 = arith.constant 1 : i32
    %39 = arith.cmpi eq, %arg0, %c1_i32 : i32
    %40 = arith.extui %39 : i1 to i32
    %c0_i32_11 = arith.constant 0 : i32
    %41 = arith.cmpi ne, %40, %c0_i32_11 : i32
    scf.if %41 {
      %c0_17 = arith.constant 0 : index
      %c0_18 = arith.constant 0 : index
      %50 = vector.load %arg14[%c0_17, %c0_18] : memref<1x256xf32, #tpu.memory_space<vmem>>, vector<1x256xf32>
      %51 = vector.broadcast %50 : vector<1x256xf32> to vector<16x256xf32>
      %52 = arith.mulf %17, %51 : vector<16x256xf32>
      %c0_19 = arith.constant 0 : index
      %c0_20 = arith.constant 0 : index
      %53 = vector.load %arg15[%c0_19, %c0_20] : memref<1x256xf32, #tpu.memory_space<vmem>>, vector<1x256xf32>
      %54 = vector.broadcast %53 : vector<1x256xf32> to vector<16x256xf32>
      %55 = arith.addf %52, %54 : vector<16x256xf32>
      %56 = arith.truncf %55 : vector<16x256xf32> to vector<16x256xbf16>
      %c0_21 = arith.constant 0 : index
      %c0_22 = arith.constant 0 : index
      %57 = vector.load %arg7[%c0_21, %c0_22] : memref<256x256xbf16, #tpu.memory_space<vmem>>, vector<256x256xbf16>
      %cst_23 = arith.constant dense<0.000000e+00> : vector<16x256xf32>
      %58 = tpu.matmul %56, %57, %cst_23 {dimension_numbers = #tpu.dot_dimension_numbers<[1], [0], [0], [1], [0, 0, 1, 1], [], []>} : vector<16x256xbf16>, vector<256x256xbf16>, vector<16x256xf32> -> vector<16x256xf32>
      %c0_24 = arith.constant 0 : index
      %c0_25 = arith.constant 0 : index
      %59 = vector.load %arg8[%c0_24, %c0_25] : memref<1x256xf32, #tpu.memory_space<vmem>>, vector<1x256xf32>
      %60 = vector.broadcast %59 : vector<1x256xf32> to vector<16x256xf32>
      %61 = arith.addf %58, %60 : vector<16x256xf32>
      %cst_26 = arith.constant 0.000000e+00 : f32
      %62 = vector.broadcast %cst_26 : f32 to vector<16x256xf32>
      %63 = arith.maximumf %61, %62 : vector<16x256xf32>
      %64 = vector.broadcast %25 : vector<16x1xf32> to vector<16x256xf32>
      %65 = arith.mulf %63, %64 : vector<16x256xf32>
      %c0_27 = arith.constant 0 : index
      %c0_28 = arith.constant 0 : index
      %66 = vector.load %arg16[%c0_27, %c0_28] : memref<1x256xf32, #tpu.memory_space<vmem>>, vector<1x256xf32>
      %cst_29 = arith.constant dense<0.000000e+00> : vector<256xf32>
      %67 = vector.multi_reduction <add>, %65, %cst_29 [0] : vector<16x256xf32> to vector<256xf32>
      %68 = vector.shape_cast %67 : vector<256xf32> to vector<1x256xf32>
      %69 = arith.addf %66, %68 : vector<1x256xf32>
      %c0_30 = arith.constant 0 : index
      %c0_31 = arith.constant 0 : index
      %70 = vector.load %arg16[%c0_30, %c0_31] : memref<1x256xf32, #tpu.memory_space<vmem>>, vector<1x256xf32>
      tpu.vector_store %arg16[%c0_30, %c0_31], %69 {strides = array<i32>} : memref<1x256xf32, #tpu.memory_space<vmem>>, vector<1x256xf32>,
      %c0_32 = arith.constant 0 : index
      %c0_33 = arith.constant 0 : index
      %71 = vector.load %arg17[%c0_32, %c0_33] : memref<1x256xf32, #tpu.memory_space<vmem>>, vector<1x256xf32>
      %72 = arith.mulf %65, %65 : vector<16x256xf32>
      %cst_34 = arith.constant dense<0.000000e+00> : vector<256xf32>
      %73 = vector.multi_reduction <add>, %72, %cst_34 [0] : vector<16x256xf32> to vector<256xf32>
      %74 = vector.shape_cast %73 : vector<256xf32> to vector<1x256xf32>
      %75 = arith.addf %71, %74 : vector<1x256xf32>
      %c0_35 = arith.constant 0 : index
      %c0_36 = arith.constant 0 : index
      %76 = vector.load %arg17[%c0_35, %c0_36] : memref<1x256xf32, #tpu.memory_space<vmem>>, vector<1x256xf32>
      tpu.vector_store %arg17[%c0_35, %c0_36], %75 {strides = array<i32>} : memref<1x256xf32, #tpu.memory_space<vmem>>, vector<1x256xf32>,
    } else {
    }
    %c1_i32_12 = arith.constant 1 : i32
    %42 = arith.cmpi eq, %arg0, %c1_i32_12 : i32
    %c2_i32_13 = arith.constant 2 : i32
    %43 = arith.cmpi eq, %arg1, %c2_i32_13 : i32
    %44 = arith.andi %42, %43 : i1
    %45 = arith.extui %44 : i1 to i32
    %c0_i32_14 = arith.constant 0 : i32
    %46 = arith.cmpi ne, %45, %c0_i32_14 : i32
    scf.if %46 {
      %c0_17 = arith.constant 0 : index
      %c0_18 = arith.constant 0 : index
      %50 = vector.load %arg16[%c0_17, %c0_18] : memref<1x256xf32, #tpu.memory_space<vmem>>, vector<1x256xf32>
      %cst_19 = arith.constant 0.0227272734 : f32
      %51 = vector.broadcast %cst_19 : f32 to vector<1x256xf32>
      %52 = arith.mulf %50, %51 : vector<1x256xf32>
      %c0_20 = arith.constant 0 : index
      %c0_21 = arith.constant 0 : index
      %53 = vector.load %arg17[%c0_20, %c0_21] : memref<1x256xf32, #tpu.memory_space<vmem>>, vector<1x256xf32>
      %cst_22 = arith.constant 0.0227272734 : f32
      %54 = vector.broadcast %cst_22 : f32 to vector<1x256xf32>
      %55 = arith.mulf %53, %54 : vector<1x256xf32>
      %56 = arith.mulf %52, %52 : vector<1x256xf32>
      %57 = arith.subf %55, %56 : vector<1x256xf32>
      %cst_23 = arith.constant 0.000000e+00 : f32
      %58 = vector.broadcast %cst_23 : f32 to vector<1x256xf32>
      %59 = arith.maximumf %57, %58 : vector<1x256xf32>
      %c0_24 = arith.constant 0 : index
      %c0_25 = arith.constant 0 : index
      %60 = vector.load %arg9[%c0_24, %c0_25] : memref<1x256xf32, #tpu.memory_space<vmem>>, vector<1x256xf32>
      %cst_26 = arith.constant 9.99999974E-6 : f32
      %61 = vector.broadcast %cst_26 : f32 to vector<1x256xf32>
      %62 = arith.addf %59, %61 : vector<1x256xf32>
      %63 = math.rsqrt %62 : vector<1x256xf32>
      %64 = arith.mulf %60, %63 : vector<1x256xf32>
      %c0_27 = arith.constant 0 : index
      %c0_28 = arith.constant 0 : index
      %65 = vector.load %arg16[%c0_27, %c0_28] : memref<1x256xf32, #tpu.memory_space<vmem>>, vector<1x256xf32>
      tpu.vector_store %arg16[%c0_27, %c0_28], %64 {strides = array<i32>} : memref<1x256xf32, #tpu.memory_space<vmem>>, vector<1x256xf32>,
      %c0_29 = arith.constant 0 : index
      %c0_30 = arith.constant 0 : index
      %66 = vector.load %arg10[%c0_29, %c0_30] : memref<1x256xf32, #tpu.memory_space<vmem>>, vector<1x256xf32>
      %67 = arith.mulf %52, %64 : vector<1x256xf32>
      %68 = arith.subf %66, %67 : vector<1x256xf32>
      %c0_31 = arith.constant 0 : index
      %c0_32 = arith.constant 0 : index
      %69 = vector.load %arg17[%c0_31, %c0_32] : memref<1x256xf32, #tpu.memory_space<vmem>>, vector<1x256xf32>
      tpu.vector_store %arg17[%c0_31, %c0_32], %68 {strides = array<i32>} : memref<1x256xf32, #tpu.memory_space<vmem>>, vector<1x256xf32>,
    } else {
    }
    %c2_i32_15 = arith.constant 2 : i32
    %47 = arith.cmpi eq, %arg0, %c2_i32_15 : i32
    %48 = arith.extui %47 : i1 to i32
    %c0_i32_16 = arith.constant 0 : i32
    %49 = arith.cmpi ne, %48, %c0_i32_16 : i32
    scf.if %49 {
      %c0_17 = arith.constant 0 : index
      %c0_18 = arith.constant 0 : index
      %50 = vector.load %arg14[%c0_17, %c0_18] : memref<1x256xf32, #tpu.memory_space<vmem>>, vector<1x256xf32>
      %51 = vector.broadcast %50 : vector<1x256xf32> to vector<16x256xf32>
      %52 = arith.mulf %17, %51 : vector<16x256xf32>
      %c0_19 = arith.constant 0 : index
      %c0_20 = arith.constant 0 : index
      %53 = vector.load %arg15[%c0_19, %c0_20] : memref<1x256xf32, #tpu.memory_space<vmem>>, vector<1x256xf32>
      %54 = vector.broadcast %53 : vector<1x256xf32> to vector<16x256xf32>
      %55 = arith.addf %52, %54 : vector<16x256xf32>
      %56 = arith.truncf %55 : vector<16x256xf32> to vector<16x256xbf16>
      %c0_21 = arith.constant 0 : index
      %c0_22 = arith.constant 0 : index
      %57 = vector.load %arg7[%c0_21, %c0_22] : memref<256x256xbf16, #tpu.memory_space<vmem>>, vector<256x256xbf16>
      %cst_23 = arith.constant dense<0.000000e+00> : vector<16x256xf32>
      %58 = tpu.matmul %56, %57, %cst_23 {dimension_numbers = #tpu.dot_dimension_numbers<[1], [0], [0], [1], [0, 0, 1, 1], [], []>} : vector<16x256xbf16>, vector<256x256xbf16>, vector<16x256xf32> -> vector<16x256xf32>
      %c0_24 = arith.constant 0 : index
      %c0_25 = arith.constant 0 : index
      %59 = vector.load %arg8[%c0_24, %c0_25] : memref<1x256xf32, #tpu.memory_space<vmem>>, vector<1x256xf32>
      %60 = vector.broadcast %59 : vector<1x256xf32> to vector<16x256xf32>
      %61 = arith.addf %58, %60 : vector<16x256xf32>
      %cst_26 = arith.constant 0.000000e+00 : f32
      %62 = vector.broadcast %cst_26 : f32 to vector<16x256xf32>
      %63 = arith.maximumf %61, %62 : vector<16x256xf32>
      %c0_27 = arith.constant 0 : index
      %c0_28 = arith.constant 0 : index
      %64 = vector.load %arg16[%c0_27, %c0_28] : memref<1x256xf32, #tpu.memory_space<vmem>>, vector<1x256xf32>
      %65 = vector.broadcast %64 : vector<1x256xf32> to vector<16x256xf32>
      %66 = arith.mulf %63, %65 : vector<16x256xf32>
      %c0_29 = arith.constant 0 : index
      %c0_30 = arith.constant 0 : index
      %67 = vector.load %arg17[%c0_29, %c0_30] : memref<1x256xf32, #tpu.memory_space<vmem>>, vector<1x256xf32>
      %68 = vector.broadcast %67 : vector<1x256xf32> to vector<16x256xf32>
      %69 = arith.addf %66, %68 : vector<16x256xf32>
      %70 = arith.truncf %69 : vector<16x256xf32> to vector<16x256xbf16>
      %c0_31 = arith.constant 0 : index
      %c0_32 = arith.constant 0 : index
      %71 = vector.load %arg11[%c0_31, %c0_32] : memref<256x128xbf16, #tpu.memory_space<vmem>>, vector<256x128xbf16>
      %cst_33 = arith.constant dense<0.000000e+00> : vector<16x128xf32>
      %72 = tpu.matmul %70, %71, %cst_33 {dimension_numbers = #tpu.dot_dimension_numbers<[1], [0], [0], [1], [0, 0, 1, 1], [], []>} : vector<16x256xbf16>, vector<256x128xbf16>, vector<16x128xf32> -> vector<16x128xf32>
      %73 = vector.extract_strided_slice %72 {offsets = [0, 0], sizes = [16, 3], strides = [1, 1]} : vector<16x128xf32> to vector<16x3xf32>
      %c0_34 = arith.constant 0 : index
      %c0_35 = arith.constant 0 : index
      %74 = vector.load %arg12[%c0_34, %c0_35] : memref<1x3xf32, #tpu.memory_space<vmem>>, vector<1x3xf32>
      %75 = vector.broadcast %74 : vector<1x3xf32> to vector<16x3xf32>
      %76 = arith.addf %73, %75 : vector<16x3xf32>
      %c0_36 = arith.constant 0 : index
      %c0_37 = arith.constant 0 : index
      %77 = vector.load %arg13[%c0_36, %c0_37] : memref<16x3xf32, #tpu.memory_space<vmem>>, vector<16x3xf32>
      tpu.vector_store %arg13[%c0_36, %c0_37], %76 {strides = array<i32>} : memref<16x3xf32, #tpu.memory_space<vmem>>, vector<16x3xf32>,
    } else {
    }
    return
  }
  func.func @transform_0(%arg0: i32, %arg1: i32) -> (i32, i32) {
    %c0_i32 = arith.constant 0 : i32
    %c0_i32_0 = arith.constant 0 : i32
    return %arg1, %c0_i32 : i32, i32
  }
  func.func @transform_1(%arg0: i32, %arg1: i32) -> (i32, i32) {
    %c0_i32 = arith.constant 0 : i32
    %c0_i32_0 = arith.constant 0 : i32
    %c0_i32_1 = arith.constant 0 : i32
    return %c0_i32, %c0_i32_0 : i32, i32
  }
  func.func @transform_2(%arg0: i32, %arg1: i32) -> (i32, i32) {
    %c0_i32 = arith.constant 0 : i32
    %c0_i32_0 = arith.constant 0 : i32
    %c0_i32_1 = arith.constant 0 : i32
    return %c0_i32, %c0_i32_0 : i32, i32
  }
  func.func @transform_3(%arg0: i32, %arg1: i32) -> (i32, i32) {
    %c0_i32 = arith.constant 0 : i32
    %c0_i32_0 = arith.constant 0 : i32
    %c0_i32_1 = arith.constant 0 : i32
    return %c0_i32, %c0_i32_0 : i32, i32
  }
  func.func @transform_4(%arg0: i32, %arg1: i32) -> (i32, i32) {
    %c0_i32 = arith.constant 0 : i32
    %c0_i32_0 = arith.constant 0 : i32
    %c0_i32_1 = arith.constant 0 : i32
    return %c0_i32, %c0_i32_0 : i32, i32
  }
  func.func @transform_5(%arg0: i32, %arg1: i32) -> (i32, i32) {
    %c0_i32 = arith.constant 0 : i32
    %c0_i32_0 = arith.constant 0 : i32
    %c0_i32_1 = arith.constant 0 : i32
    return %c0_i32, %c0_i32_0 : i32, i32
  }
  func.func @transform_6(%arg0: i32, %arg1: i32) -> (i32, i32) {
    %c0_i32 = arith.constant 0 : i32
    %c0_i32_0 = arith.constant 0 : i32
    %c0_i32_1 = arith.constant 0 : i32
    return %c0_i32, %c0_i32_0 : i32, i32
  }
  func.func @transform_7(%arg0: i32, %arg1: i32) -> (i32, i32) {
    %c0_i32 = arith.constant 0 : i32
    %c0_i32_0 = arith.constant 0 : i32
    %c0_i32_1 = arith.constant 0 : i32
    return %c0_i32, %c0_i32_0 : i32, i32
  }
  func.func @transform_8(%arg0: i32, %arg1: i32) -> (i32, i32) {
    %c0_i32 = arith.constant 0 : i32
    %c0_i32_0 = arith.constant 0 : i32
    %c0_i32_1 = arith.constant 0 : i32
    return %c0_i32, %c0_i32_0 : i32, i32
  }
  func.func @transform_9(%arg0: i32, %arg1: i32) -> (i32, i32) {
    %c0_i32 = arith.constant 0 : i32
    %c0_i32_0 = arith.constant 0 : i32
    %c0_i32_1 = arith.constant 0 : i32
    return %c0_i32, %c0_i32_0 : i32, i32
  }
  func.func @transform_10(%arg0: i32, %arg1: i32) -> (i32, i32) {
    %c0_i32 = arith.constant 0 : i32
    %c0_i32_0 = arith.constant 0 : i32
    %c0_i32_1 = arith.constant 0 : i32
    return %c0_i32, %c0_i32_0 : i32, i32
  }
  func.func @transform_11(%arg0: i32, %arg1: i32) -> (i32, i32) {
    %c0_i32 = arith.constant 0 : i32
    %c0_i32_0 = arith.constant 0 : i32
    return %arg1, %c0_i32 : i32, i32
  }
}

</mosaic_0001>

<llo_original>
// kernel: mlp_forward.1
$region0: #{mlp_forward.1}
  #allocation0 [shape = 'u32[]', space=smem, size = 0x4, offset = 0x4, fixed_abs, tag = 'smem constant byte address 0x4 - core index']
  #allocation1 [shape = 'u32[72,128]{1,0:T(1,128)}', space=vmem, size = 0x9000, scoped, tag = 'internal scratch']
  #allocation2 [shape = 'f32[1,256]{1,0:T(1,128)}', space=vmem, size = 0x400, scoped, tag = 'scratch operand']
  #allocation3 [shape = 'f32[1,256]{1,0:T(1,128)}', space=vmem, size = 0x400, scoped, tag = 'scratch operand']
  #allocation4 [shape = 'f32[1,256]{1,0:T(1,128)}', space=vmem, size = 0x400, scoped, tag = 'scratch operand']
  #allocation5 [shape = 'f32[1,256]{1,0:T(1,128)}', space=vmem, size = 0x400, scoped, tag = 'scratch operand']
  %s0 = inlined_call_operand.vmem [shape: f32[48,2], index: 0, kind: input, shape index: {}]
  %s1 = inlined_call_operand.vmem [shape: f32[2,256], index: 1, kind: input, shape index: {}]
  %s2 = inlined_call_operand.vmem [shape: f32[1,256], index: 2, kind: input, shape index: {}]
  %s3 = inlined_call_operand.vmem [shape: f32[1,256], index: 3, kind: input, shape index: {}]
  %s4 = inlined_call_operand.vmem [shape: f32[1,256], index: 4, kind: input, shape index: {}]
  %s5 = inlined_call_operand.hbm [shape: bf16[256,256], index: 5, kind: input, shape index: {}]
  %s6 = inlined_call_operand.vmem [shape: f32[1,256], index: 6, kind: input, shape index: {}]
  %s7 = inlined_call_operand.vmem [shape: f32[1,256], index: 7, kind: input, shape index: {}]
  %s8 = inlined_call_operand.vmem [shape: f32[1,256], index: 8, kind: input, shape index: {}]
  %s9 = inlined_call_operand.vmem [shape: bf16[256,128], index: 9, kind: input, shape index: {}]
  %s10 = inlined_call_operand.vmem [shape: f32[1,3], index: 10, kind: input, shape index: {}]
  %s11 = inlined_call_operand.vmem [shape: f32[48,3], index: 11, kind: output, shape index: {}]
  %s12 = sld [smem:[#allocation0]]
  $region105: #{mlp_forward.1} parent=0
    _
  %s14 = ssub.s32 1, %s12
  %s15 = scalar_select 0, %s14, %s12
  $region1: #{mlp_forward.1} parent=0
    #allocation6 [shape = 'u8[131072]{0}', space=vmem, size = 0x20000, scoped, tag = 'input window, operand 5, single buffered']
    #allocation7 [shape = 's32[2]{0}', space=sflag, size = 0x8, scoped, tag = 'scoped memory for mlp_forward.1']
    %16 = vsyncpa [#allocation7], 0
    loop: start=0, step=1, limit=11
    $region2: #{mlp_forward.1} parent=1 // loop_pre_header
      _
    $region3: #{mlp_forward.1} parent=1 // loop_header
      %s18 = sphi 0, %s22
      %p19 = scmp.ge.s32.totalorder %s18, 11
      %s25 = sphi 0, %s37
      %s26 = sphi 0, %s33
      %s27 = sphi 0, %s25
      %s28 = sphi 0, %s26
      %s29 = sphi 0, %s27
      %s30 = sphi 0, %s28
      %s40 = sphi 0, %s42
      %s43 = sphi 0, %s40
      %s44 = sphi 0, %s43
      %s60 = sphi 0, %s44
      %s64 = sphi 0, %s64
      %s66 = sphi 0, %s64
      %s67 = sphi 0, %s66
      %s81 = sphi 0, %s67
      %s85 = sphi 0, %s85
      %s87 = sphi 0, %s85
      %s88 = sphi 0, %s87
      %s102 = sphi 0, %s88
      %s106 = sphi 0, %s106
      %s108 = sphi 0, %s106
      %s109 = sphi 0, %s108
      %s123 = sphi 0, %s109
      %s127 = sphi 0, %s127
      %s129 = sphi 0, %s127
      %s130 = sphi 0, %s129
      %s144 = sphi 0, %s130
      %s148 = sphi 0, %s148
      %s150 = sphi 0, %s148
      %s151 = sphi 0, %s150
      %s165 = sphi 0, %s151
      %s169 = sphi 0, %s169
      %s171 = sphi 0, %s169
      %s172 = sphi 0, %s171
      %s186 = sphi 0, %s172
      %s190 = sphi 0, %s190
      %s192 = sphi 0, %s190
      %s193 = sphi 0, %s192
      %s207 = sphi 0, %s193
      %s211 = sphi 0, %s211
      %s213 = sphi 0, %s211
      %s214 = sphi 0, %s213
      %s228 = sphi 0, %s214
      %s232 = sphi 0, %s232
      %s234 = sphi 0, %s232
      %s235 = sphi 0, %s234
      %s249 = sphi 0, %s235
      %s253 = sphi 0, %s253
      %s255 = sphi 0, %s253
      %s256 = sphi 0, %s255
      %s270 = sphi 0, %s256
      %s276 = sphi 0, %s278
      %s279 = sphi 0, %s276
      %s280 = sphi 0, %s279
      %s296 = sphi 0, %s280
    $region4: #{mlp_forward.1} parent=1 // loop_header_branch
      %21 = sbr.rel (%p19) target = $region8
    $region5: #{mlp_forward.1} parent=1 // loop_body
      %s23 = ssub.s32 %s18, 1
      %s24 = ssub.s32 %s18, 2
      %s31 = sadd.s32 1, %s26
      %p32 = scmp.ge.s32.totalorder %s31, 3
      %s33 = scalar_select %p32, 0, %s31
      %s34 = sadd.s32 1, %s25
      %s35 = scalar_select %p32, %s34, %s25
      %p36 = scmp.ge.s32.totalorder %s35, 3
      %s37 = scalar_select %p36, 0, %s35
      %s38 = ssub.s32 %s26, %s33
      %p39 = scmp.eq.s32.totalorder %s38, 0
      %s41 = sadd.s32 %s40, 1
      %s42 = scalar_select %p39, %s40, %s41
      %p45 = pneg %p39
      %p46 = scmp.eq.s32.totalorder %s18, 8
      %p47 = por %p45, %p46
      %p48 = scmp.ne.s32.totalorder %s40, %s43
      %p49 = scmp.eq.s32.totalorder %s18, 0
      %p50 = por %p48, %p49
      %p51 = scmp.ne.s32.totalorder %s40, %s43
      %p52 = scmp.eq.s32.totalorder %s23, 8
      %p53 = por %p51, %p52
      %p54 = scmp.ne.s32.totalorder %s43, %s44
      %p55 = scmp.eq.s32.totalorder %s23, 0
      %p56 = por %p54, %p55
      %p57 = scmp.ne.s32.totalorder %s43, %s44
      %p58 = scmp.eq.s32.totalorder %s24, 8
      %p59 = por %p57, %p58
      %p61 = scmp.ne.s32.totalorder %s44, %s60
      %p62 = scmp.eq.s32.totalorder %s24, 0
      %p63 = por %p61, %p62
      %s65 = sadd.s32 %s64, 1
      %p68 = scmp.eq.s32.totalorder %s18, 8
      %p69 = scmp.ne.s32.totalorder %s64, %s66
      %p70 = scmp.eq.s32.totalorder %s18, 0
      %p71 = por %p69, %p70
      %p72 = scmp.ne.s32.totalorder %s64, %s66
      %p73 = scmp.eq.s32.totalorder %s23, 8
      %p74 = por %p72, %p73
      %p75 = scmp.ne.s32.totalorder %s66, %s67
      %p76 = scmp.eq.s32.totalorder %s23, 0
      %p77 = por %p75, %p76
      %p78 = scmp.ne.s32.totalorder %s66, %s67
      %p79 = scmp.eq.s32.totalorder %s24, 8
      %p80 = por %p78, %p79
      %p82 = scmp.ne.s32.totalorder %s67, %s81
      %p83 = scmp.eq.s32.totalorder %s24, 0
      %p84 = por %p82, %p83
      %s86 = sadd.s32 %s85, 1
      %p89 = scmp.eq.s32.totalorder %s18, 8
      %p90 = scmp.ne.s32.totalorder %s85, %s87
      %p91 = scmp.eq.s32.totalorder %s18, 0
      %p92 = por %p90, %p91
      %p93 = scmp.ne.s32.totalorder %s85, %s87
      %p94 = scmp.eq.s32.totalorder %s23, 8
      %p95 = por %p93, %p94
      %p96 = scmp.ne.s32.totalorder %s87, %s88
      %p97 = scmp.eq.s32.totalorder %s23, 0
      %p98 = por %p96, %p97
      %p99 = scmp.ne.s32.totalorder %s87, %s88
      %p100 = scmp.eq.s32.totalorder %s24, 8
      %p101 = por %p99, %p100
      %p103 = scmp.ne.s32.totalorder %s88, %s102
      %p104 = scmp.eq.s32.totalorder %s24, 0
      %p105 = por %p103, %p104
      %s107 = sadd.s32 %s106, 1
      %p110 = scmp.eq.s32.totalorder %s18, 8
      %p111 = scmp.ne.s32.totalorder %s106, %s108
      %p112 = scmp.eq.s32.totalorder %s18, 0
      %p113 = por %p111, %p112
      %p114 = scmp.ne.s32.totalorder %s106, %s108
      %p115 = scmp.eq.s32.totalorder %s23, 8
      %p116 = por %p114, %p115
      %p117 = scmp.ne.s32.totalorder %s108, %s109
      %p118 = scmp.eq.s32.totalorder %s23, 0
      %p119 = por %p117, %p118
      %p120 = scmp.ne.s32.totalorder %s108, %s109
      %p121 = scmp.eq.s32.totalorder %s24, 8
      %p122 = por %p120, %p121
      %p124 = scmp.ne.s32.totalorder %s109, %s123
      %p125 = scmp.eq.s32.totalorder %s24, 0
      %p126 = por %p124, %p125
      %s128 = sadd.s32 %s127, 1
      %p131 = scmp.eq.s32.totalorder %s18, 8
      %p132 = scmp.ne.s32.totalorder %s127, %s129
      %p133 = scmp.eq.s32.totalorder %s18, 0
      %p134 = por %p132, %p133
      %p135 = scmp.ne.s32.totalorder %s127, %s129
      %p136 = scmp.eq.s32.totalorder %s23, 8
      %p137 = por %p135, %p136
      %p138 = scmp.ne.s32.totalorder %s129, %s130
      %p139 = scmp.eq.s32.totalorder %s23, 0
      %p140 = por %p138, %p139
      %p141 = scmp.ne.s32.totalorder %s129, %s130
      %p142 = scmp.eq.s32.totalorder %s24, 8
      %p143 = por %p141, %p142
      %p145 = scmp.ne.s32.totalorder %s130, %s144
      %p146 = scmp.eq.s32.totalorder %s24, 0
      %p147 = por %p145, %p146
      %s149 = sadd.s32 %s148, 1
      %p152 = scmp.eq.s32.totalorder %s18, 8
      %p153 = scmp.ne.s32.totalorder %s148, %s150
      %p154 = scmp.eq.s32.totalorder %s18, 0
      %p155 = por %p153, %p154
      %p156 = scmp.ne.s32.totalorder %s148, %s150
      %p157 = scmp.eq.s32.totalorder %s23, 8
      %p158 = por %p156, %p157
      %p159 = scmp.ne.s32.totalorder %s150, %s151
      %p160 = scmp.eq.s32.totalorder %s23, 0
      %p161 = por %p159, %p160
      %p162 = scmp.ne.s32.totalorder %s150, %s151
      %p163 = scmp.eq.s32.totalorder %s24, 8
      %p164 = por %p162, %p163
      %p166 = scmp.ne.s32.totalorder %s151, %s165
      %p167 = scmp.eq.s32.totalorder %s24, 0
      %p168 = por %p166, %p167
      %s170 = sadd.s32 %s169, 1
      %p173 = scmp.eq.s32.totalorder %s18, 8
      %p174 = scmp.ne.s32.totalorder %s169, %s171
      %p175 = scmp.eq.s32.totalorder %s18, 0
      %p176 = por %p174, %p175
      %p177 = scmp.ne.s32.totalorder %s169, %s171
      %p178 = scmp.eq.s32.totalorder %s23, 8
      %p179 = por %p177, %p178
      %p180 = scmp.ne.s32.totalorder %s171, %s172
      %p181 = scmp.eq.s32.totalorder %s23, 0
      %p182 = por %p180, %p181
      %p183 = scmp.ne.s32.totalorder %s171, %s172
      %p184 = scmp.eq.s32.totalorder %s24, 8
      %p185 = por %p183, %p184
      %p187 = scmp.ne.s32.totalorder %s172, %s186
      %p188 = scmp.eq.s32.totalorder %s24, 0
      %p189 = por %p187, %p188
      %s191 = sadd.s32 %s190, 1
      %p194 = scmp.eq.s32.totalorder %s18, 8
      %p195 = scmp.ne.s32.totalorder %s190, %s192
      %p196 = scmp.eq.s32.totalorder %s18, 0
      %p197 = por %p195, %p196
      %p198 = scmp.ne.s32.totalorder %s190, %s192
      %p199 = scmp.eq.s32.totalorder %s23, 8
      %p200 = por %p198, %p199
      %p201 = scmp.ne.s32.totalorder %s192, %s193
      %p202 = scmp.eq.s32.totalorder %s23, 0
      %p203 = por %p201, %p202
      %p204 = scmp.ne.s32.totalorder %s192, %s193
      %p205 = scmp.eq.s32.totalorder %s24, 8
      %p206 = por %p204, %p205
      %p208 = scmp.ne.s32.totalorder %s193, %s207
      %p209 = scmp.eq.s32.totalorder %s24, 0
      %p210 = por %p208, %p209
      %s212 = sadd.s32 %s211, 1
      %p215 = scmp.eq.s32.totalorder %s18, 8
      %p216 = scmp.ne.s32.totalorder %s211, %s213
      %p217 = scmp.eq.s32.totalorder %s18, 0
      %p218 = por %p216, %p217
      %p219 = scmp.ne.s32.totalorder %s211, %s213
      %p220 = scmp.eq.s32.totalorder %s23, 8
      %p221 = por %p219, %p220
      %p222 = scmp.ne.s32.totalorder %s213, %s214
      %p223 = scmp.eq.s32.totalorder %s23, 0
      %p224 = por %p222, %p223
      %p225 = scmp.ne.s32.totalorder %s213, %s214
      %p226 = scmp.eq.s32.totalorder %s24, 8
      %p227 = por %p225, %p226
      %p229 = scmp.ne.s32.totalorder %s214, %s228
      %p230 = scmp.eq.s32.totalorder %s24, 0
      %p231 = por %p229, %p230
      %s233 = sadd.s32 %s232, 1
      %p236 = scmp.eq.s32.totalorder %s18, 8
      %p237 = scmp.ne.s32.totalorder %s232, %s234
      %p238 = scmp.eq.s32.totalorder %s18, 0
      %p239 = por %p237, %p238
      %p240 = scmp.ne.s32.totalorder %s232, %s234
      %p241 = scmp.eq.s32.totalorder %s23, 8
      %p242 = por %p240, %p241
      %p243 = scmp.ne.s32.totalorder %s234, %s235
      %p244 = scmp.eq.s32.totalorder %s23, 0
      %p245 = por %p243, %p244
      %p246 = scmp.ne.s32.totalorder %s234, %s235
      %p247 = scmp.eq.s32.totalorder %s24, 8
      %p248 = por %p246, %p247
      %p250 = scmp.ne.s32.totalorder %s235, %s249
      %p251 = scmp.eq.s32.totalorder %s24, 0
      %p252 = por %p250, %p251
      %s254 = sadd.s32 %s253, 1
      %p257 = scmp.eq.s32.totalorder %s18, 8
      %p258 = scmp.ne.s32.totalorder %s253, %s255
      %p259 = scmp.eq.s32.totalorder %s18, 0
      %p260 = por %p258, %p259
      %p261 = scmp.ne.s32.totalorder %s253, %s255
      %p262 = scmp.eq.s32.totalorder %s23, 8
      %p263 = por %p261, %p262
      %p264 = scmp.ne.s32.totalorder %s255, %s256
      %p265 = scmp.eq.s32.totalorder %s23, 0
      %p266 = por %p264, %p265
      %p267 = scmp.ne.s32.totalorder %s255, %s256
      %p268 = scmp.eq.s32.totalorder %s24, 8
      %p269 = por %p267, %p268
      %p271 = scmp.ne.s32.totalorder %s256, %s270
      %p272 = scmp.eq.s32.totalorder %s24, 0
      %p273 = por %p271, %p272
      %s274 = ssub.s32 %s26, %s33
      %p275 = scmp.eq.s32.totalorder %s274, 0
      %s277 = sadd.s32 %s276, 1
      %s278 = scalar_select %p275, %s276, %s277
      %p281 = pneg %p275
      %p282 = scmp.eq.s32.totalorder %s18, 8
      %p283 = por %p281, %p282
      %p284 = scmp.ne.s32.totalorder %s276, %s279
      %p285 = scmp.eq.s32.totalorder %s18, 0
      %p286 = por %p284, %p285
      %p287 = scmp.ne.s32.totalorder %s276, %s279
      %p288 = scmp.eq.s32.totalorder %s23, 8
      %p289 = por %p287, %p288
      %p290 = scmp.ne.s32.totalorder %s279, %s280
      %p291 = scmp.eq.s32.totalorder %s23, 0
      %p292 = por %p290, %p291
      %p293 = scmp.ne.s32.totalorder %s279, %s280
      %p294 = scmp.eq.s32.totalorder %s24, 8
      %p295 = por %p293, %p294
      %p297 = scmp.ne.s32.totalorder %s280, %s296
      %p298 = scmp.eq.s32.totalorder %s24, 0
      %p299 = por %p297, %p298
      %p300 = scmp.le.s32.totalorder 1, %s18
      %p301 = scmp.lt.s32.totalorder %s18, 10
      %p302 = pnand %p300, %p301
      %p303 = pneg %p302
      // Predicated region
      $region9: #{mlp_forward.1} parent=5 // pred_check
        _
      $region10: #{mlp_forward.1} parent=5 // pred_check_branch
        %305 = sbr.rel (%p302) target = $region12
      $region11: #{mlp_forward.1} parent=5 // pred_region
        %s306 = ssub.s32 %s18, 1
        // Predicated region
        $region13: #{mlp_forward.1} parent=11 // pred_check
          %p307 = pneg %p77
        $region14: #{mlp_forward.1} parent=11 // pred_check_branch
          %309 = sbr.rel (%p307) target = $region16
        $region15: #{mlp_forward.1} parent=11 // pred_region
          _
        $region16: #{mlp_forward.1} parent=11 // pred_fallthru
          _
        // Predicated region
        $region17: #{mlp_forward.1} parent=11 // pred_check
          %p310 = pneg %p98
        $region18: #{mlp_forward.1} parent=11 // pred_check_branch
          %312 = sbr.rel (%p310) target = $region20
        $region19: #{mlp_forward.1} parent=11 // pred_region
          _
        $region20: #{mlp_forward.1} parent=11 // pred_fallthru
          _
        // Predicated region
        $region21: #{mlp_forward.1} parent=11 // pred_check
          %p313 = pneg %p119
        $region22: #{mlp_forward.1} parent=11 // pred_check_branch
          %315 = sbr.rel (%p313) target = $region24
        $region23: #{mlp_forward.1} parent=11 // pred_region
          _
        $region24: #{mlp_forward.1} parent=11 // pred_fallthru
          _
        // Predicated region
        $region25: #{mlp_forward.1} parent=11 // pred_check
          %p316 = pneg %p140
        $region26: #{mlp_forward.1} parent=11 // pred_check_branch
          %318 = sbr.rel (%p316) target = $region28
        $region27: #{mlp_forward.1} parent=11 // pred_region
          _
        $region28: #{mlp_forward.1} parent=11 // pred_fallthru
          _
        // Predicated region
        $region29: #{mlp_forward.1} parent=11 // pred_check
          %p319 = pneg %p161
        $region30: #{mlp_forward.1} parent=11 // pred_check_branch
          %321 = sbr.rel (%p319) target = $region32
        $region31: #{mlp_forward.1} parent=11 // pred_region
          %323 = vsyncadd [#allocation7], 0
          %s324 = sshll.u32 %s5, 4
          %s325 = int_to_ptr.hbm [resolvable:$true] %s324
          %s326 = sshll.u32 [#allocation6], 4
          %s327 = int_to_ptr.vmem [resolvable:$true] %s326
          %332 = dma.hbm_to_vmem [thread:$0]  %s325, 4096, %s327, [#allocation7], 128, 128, 8
        $region32: #{mlp_forward.1} parent=11 // pred_fallthru
          _
        // Predicated region
        $region33: #{mlp_forward.1} parent=11 // pred_check
          %p333 = pneg %p182
        $region34: #{mlp_forward.1} parent=11 // pred_check_branch
          %335 = sbr.rel (%p333) target = $region36
        $region35: #{mlp_forward.1} parent=11 // pred_region
          _
        $region36: #{mlp_forward.1} parent=11 // pred_fallthru
          _
        // Predicated region
        $region37: #{mlp_forward.1} parent=11 // pred_check
          %p336 = pneg %p203
        $region38: #{mlp_forward.1} parent=11 // pred_check_branch
          %338 = sbr.rel (%p336) target = $region40
        $region39: #{mlp_forward.1} parent=11 // pred_region
          _
        $region40: #{mlp_forward.1} parent=11 // pred_fallthru
          _
        // Predicated region
        $region41: #{mlp_forward.1} parent=11 // pred_check
          %p339 = pneg %p224
        $region42: #{mlp_forward.1} parent=11 // pred_check_branch
          %341 = sbr.rel (%p339) target = $region44
        $region43: #{mlp_forward.1} parent=11 // pred_region
          _
        $region44: #{mlp_forward.1} parent=11 // pred_fallthru
          _
        // Predicated region
        $region45: #{mlp_forward.1} parent=11 // pred_check
          %p342 = pneg %p245
        $region46: #{mlp_forward.1} parent=11 // pred_check_branch
          %344 = sbr.rel (%p342) target = $region48
        $region47: #{mlp_forward.1} parent=11 // pred_region
          _
        $region48: #{mlp_forward.1} parent=11 // pred_fallthru
          _
        // Predicated region
        $region49: #{mlp_forward.1} parent=11 // pred_check
          %p345 = pneg %p266
        $region50: #{mlp_forward.1} parent=11 // pred_check_branch
          %347 = sbr.rel (%p345) target = $region52
        $region51: #{mlp_forward.1} parent=11 // pred_region
          _
        $region52: #{mlp_forward.1} parent=11 // pred_fallthru
          _
      $region12: #{mlp_forward.1} parent=5 // pred_fallthru
        _
      %p348 = scmp.lt.s32.totalorder %s18, 9
      // Predicated region
      $region53: #{mlp_forward.1} parent=5 // pred_check
        %p349 = pneg %p348
      $region54: #{mlp_forward.1} parent=5 // pred_check_branch
        %351 = sbr.rel (%p349) target = $region56
      $region55: #{mlp_forward.1} parent=5 // pred_region
        // Predicated region
        $region57: #{mlp_forward.1} parent=55 // pred_check
          %p352 = pneg %p50
        $region58: #{mlp_forward.1} parent=55 // pred_check_branch
          %354 = sbr.rel (%p352) target = $region60
        $region59: #{mlp_forward.1} parent=55 // pred_region
          %s355 = smul.u32 2, %s26
          %p356 = scmp.lt.s32.totalorder %s355, 5
          %s357 = scalar_select %p356, %s355, 5
          %s358 = smul.addr %s357, 8
          %s359 = scalar_lea.vmem %s0, %s358
          %s360 = smul.u32 2, %s26
        $region60: #{mlp_forward.1} parent=55 // pred_fallthru
          _
      $region56: #{mlp_forward.1} parent=5 // pred_fallthru
        _
      %p361 = scmp.le.s32.totalorder 1, %s18
      %p362 = scmp.lt.s32.totalorder %s18, 10
      %p363 = pnand %p361, %p362
      %p364 = pneg %p363
      // Predicated region
      $region61: #{mlp_forward.1} parent=5 // pred_check
        _
      $region62: #{mlp_forward.1} parent=5 // pred_check_branch
        %366 = sbr.rel (%p363) target = $region64
      $region63: #{mlp_forward.1} parent=5 // pred_region
        %s367 = ssub.s32 %s18, 1
        // Predicated region
        $region65: #{mlp_forward.1} parent=63 // pred_check
          %p368 = pneg %p161
        $region66: #{mlp_forward.1} parent=63 // pred_check_branch
          %370 = sbr.rel (%p368) target = $region68
        $region67: #{mlp_forward.1} parent=63 // pred_region
          %372 = dma.done [#allocation7], 4096
        $region68: #{mlp_forward.1} parent=63 // pred_fallthru
          _
        %s373 = smul.u32 2, %s28
        %p374 = scmp.lt.s32.totalorder %s373, 5
        %s375 = scalar_select %p374, %s373, 5
        %s376 = smul.addr %s375, 8
        %s377 = scalar_lea.vmem %s0, %s376
        %p378 = pneg %p56
        %p379 = pneg %p53
        %p380 = pneg %p77
        %p381 = pneg %p74
        %p382 = pneg %p98
        %p383 = pneg %p95
        %p384 = pneg %p119
        %p385 = pneg %p116
        %p386 = pneg %p140
        %p387 = pneg %p137
        %p388 = pneg %p161
        %p389 = pneg %p158
        %p390 = pneg %p182
        %p391 = pneg %p179
        %p392 = pneg %p203
        %p393 = pneg %p200
        %p394 = pneg %p224
        %p395 = pneg %p221
        %p396 = pneg %p245
        %p397 = pneg %p242
        %p398 = pneg %p266
        %p399 = pneg %p263
        %p400 = pneg %p292
        %p401 = pneg %p289
        %s402 = smul.u32 2, %s28
        %p403 = scmp.lt.s32.totalorder %s402, 5
        %s404 = scalar_select %p403, %s402, 5
        %s405 = smul.addr %s404, 8
        %s406 = scalar_lea.vmem %s11, %s405
        %s407 = smul.u32 2, %s28
        %p408 = scmp.lt.s32.totalorder %s407, 5
        %s409 = scalar_select %p408, %s407, 5
        %s410 = smul.addr %s409, 8
        %s411 = scalar_lea.vmem %s0, %s410
        %s412 = smul.u32 2, %s28
        %s413 = smul.u32 2, %s28
        %p414 = scmp.lt.s32.totalorder %s413, 5
        %s415 = scalar_select %p414, %s413, 5
        %s416 = smul.addr %s415, 8
        %s417 = scalar_lea.vmem %s11, %s416
        %s418 = smul.u32 2, %s28
        %v419 = vld [vmem:[%s411] sm:$0xff]
        %v420 = vld [vmem:[%s411 + $0x8] sm:$0xff]
        %v421 = vld [vmem:[%s1] sm:$0xf]
        %423 = vset.pattern.permute.xlu0 0
        %424 = vperm.xlu0 %423, %v419
        %v425 = vpop.permute.xlu0 %424
        %428 = vset.pattern.permute.xlu0 0
        %429 = vperm.xlu0 %428, %v420
        %v430 = vpop.permute.xlu0 %429
        %v433 = vperm.slane %v421, 0
        %v434 = vperm.slane %v421, 2
        %v437 = vperm.slane %v433, 0
        %v438 = vperm.slane %v434, 0
        %v439 = vmul.f32 %v425, %v437
        %v440 = vmul.f32 %v425, %v438
        %v441 = vmul.f32 %v430, %v437
        %v442 = vmul.f32 %v430, %v438
        %443 = vset.pattern.permute.xlu0 1
        %444 = vperm.xlu0 %443, %v419
        %v445 = vpop.permute.xlu0 %444
        %447 = vset.pattern.permute.xlu0 1
        %448 = vperm.xlu0 %447, %v420
        %v449 = vpop.permute.xlu0 %448
        %v451 = vperm.slane %v421, 1
        %v452 = vperm.slane %v421, 3
        %v455 = vperm.slane %v451, 1
        %v456 = vperm.slane %v452, 1
        %v457 = vmul.f32 %v445, %v455
        %v458 = vmul.f32 %v445, %v456
        %v459 = vmul.f32 %v449, %v455
        %v460 = vmul.f32 %v449, %v456
        %v461 = vadd.f32 %v439, %v457
        %v462 = vadd.f32 %v440, %v458
        %v463 = vadd.f32 %v441, %v459
        %v464 = vadd.f32 %v442, %v460
        %v465 = vld [vmem:[%s2] sm:$0x3]
        %v467 = vperm.slane %v465, 0
        %v468 = vperm.slane %v465, 1
        %v471 = vadd.f32 %v461, %v467
        %v472 = vadd.f32 %v462, %v468
        %v473 = vadd.f32 %v463, %v467
        %v474 = vadd.f32 %v464, %v468
        %v475 = vmax.f32 %v471, 0.0
        %v476 = vmax.f32 %v472, 0.0
        %v477 = vmax.f32 %v473, 0.0
        %v478 = vmax.f32 %v474, 0.0
        %v479 = vlaneseq
        %v480 = vshrl.u32 %v479, 7
        %v481 = vadd.s32 %v480, 8
        %s482 = smul.u32 %s28, 16
        %v483 = vstv %s482
        %v484 = vadd.s32 %v480, %v483
        %v485 = vadd.s32 %v481, %v483
        %vm486 = vcmp.lt.s32.totalorder %v484, 44
        %vm487 = vcmp.lt.s32.totalorder %v485, 44
        %v488 = vsel %vm486, 1, 0
        %v489 = vsel %vm487, 1, 0
        %v490 = vcvt.s32.f32 %v488
        %v491 = vcvt.s32.f32 %v489
        %p492 = scmp.eq.s32.totalorder %s27, 0
        %p493 = scmp.eq.s32.totalorder %s28, 0
        %p494 = pnand %p492, %p493
        %p495 = pneg %p494
        // Predicated region
        $region69: #{mlp_forward.1} parent=63 // pred_check
          _
        $region70: #{mlp_forward.1} parent=63 // pred_check_branch
          %497 = sbr.rel (%p494) target = $region72
        $region71: #{mlp_forward.1} parent=63 // pred_region
          %v498 = vlaneseq
          %vm499 = vcmp.ge.s32.totalorder %v498, 0
          %vm500 = vcmp.lt.s32.totalorder %v498, 256
          %vm501 = vmand %vm499, %vm500
          %502 = vst.msk [vmem:[#allocation2] sm:$0x3] %vm501, 0.0
          %503 = vst.msk [vmem:[#allocation3] sm:$0x3] %vm501, 0.0
          %504 = vst.msk [vmem:[#allocation4] sm:$0x3] %vm501, 0.0
          %505 = vst.msk [vmem:[#allocation5] sm:$0x3] %vm501, 0.0
        $region72: #{mlp_forward.1} parent=63 // pred_fallthru
          _
        // Predicated region
        $region73: #{mlp_forward.1} parent=63 // pred_check
          %p506 = pneg %p492
        $region74: #{mlp_forward.1} parent=63 // pred_check_branch
          %508 = sbr.rel (%p506) target = $region76
        $region75: #{mlp_forward.1} parent=63 // pred_region
          %v509 = vmul.f32 %v475, %v490
          %v510 = vmul.f32 %v476, %v490
          %v511 = vmul.f32 %v477, %v491
          %v512 = vmul.f32 %v478, %v491
          %v513 = vld [vmem:[#allocation2] sm:$0x3]
          %v514 = vadd.f32 %v509, %v511
          %v515 = vrot.slane %v514, 4
          %v516 = vadd.f32 %v514, %v515
          %v517 = vrot.slane %v516, 2
          %v518 = vadd.f32 %v516, %v517
          %v519 = vrot.slane %v518, 1
          %v520 = vadd.f32 %v518, %v519
          %v521 = vadd.f32 %v510, %v512
          %v522 = vrot.slane %v521, 4
          %v523 = vadd.f32 %v521, %v522
          %v524 = vrot.slane %v523, 2
          %v525 = vadd.f32 %v523, %v524
          %v526 = vrot.slane %v525, 1
          %v527 = vadd.f32 %v525, %v526
          %v530 = vrot.slane %v527, 7
          %vm531 = vcmask 1040384
          %v532 = vsel %vm531, %v520, %v530
          %v534 = vadd.f32 %v513, %v532
          %v535 = vlaneseq
          %vm536 = vcmp.ge.s32.totalorder %v535, 0
          %vm537 = vcmp.lt.s32.totalorder %v535, 256
          %vm538 = vmand %vm536, %vm537
          %539 = vst.msk [vmem:[#allocation2] sm:$0x3] %vm538, %v534
          %v540 = vld [vmem:[#allocation3] sm:$0x3]
          %v541 = vmul.f32 %v509, %v509
          %v542 = vmul.f32 %v510, %v510
          %v543 = vmul.f32 %v511, %v511
          %v544 = vmul.f32 %v512, %v512
          %v545 = vadd.f32 %v541, %v543
          %v546 = vrot.slane %v545, 4
          %v547 = vadd.f32 %v545, %v546
          %v548 = vrot.slane %v547, 2
          %v549 = vadd.f32 %v547, %v548
          %v550 = vrot.slane %v549, 1
          %v551 = vadd.f32 %v549, %v550
          %v552 = vadd.f32 %v542, %v544
          %v553 = vrot.slane %v552, 4
          %v554 = vadd.f32 %v552, %v553
          %v555 = vrot.slane %v554, 2
          %v556 = vadd.f32 %v554, %v555
          %v557 = vrot.slane %v556, 1
          %v558 = vadd.f32 %v556, %v557
          %v561 = vrot.slane %v558, 7
          %v562 = vsel %vm531, %v551, %v561
          %v564 = vadd.f32 %v540, %v562
          %565 = vst.msk [vmem:[#allocation3] sm:$0x3] %vm538, %v564
        $region76: #{mlp_forward.1} parent=63 // pred_fallthru
          _
        %p566 = scmp.eq.s32.totalorder %s28, 2
        %p567 = pnand %p492, %p566
        %p568 = pneg %p567
        // Predicated region
        $region77: #{mlp_forward.1} parent=63 // pred_check
          _
        $region78: #{mlp_forward.1} parent=63 // pred_check_branch
          %570 = sbr.rel (%p567) target = $region80
        $region79: #{mlp_forward.1} parent=63 // pred_region
          %v571 = vld [vmem:[#allocation2] sm:$0x3]
          %v572 = vmul.f32 %v571, 0.022727273
          %v573 = vld [vmem:[#allocation3] sm:$0x3]
          %v574 = vmul.f32 %v573, 0.022727273
          %v575 = vmul.f32 %v572, %v572
          %v576 = vsub.f32 %v574, %v575
          %v577 = vmax.f32 %v576, 0.0
          %v578 = vld [vmem:[%s3] sm:$0x3]
          %v579 = vadd.f32 %v577, 1e-05
          %v580 = vrsqrt.pop %v579
          %v581 = vmul.f32 %v580, %v579
          %v582 = vmul.f32 %v581, %v580
          %v583 = vmul.f32 0.5, %v582
          %v584 = vsub.f32 1.5, %v583
          %v585 = vmul.f32 %v580, %v584
          %vm586 = vweird.f32 %v579
          %vm587 = vweird.f32 %v580
          %vm588 = vmor %vm586, %vm587
          %v589 = vsel %vm588, %v580, %v585
          %v590 = vmul.f32 %v578, %v589
          %v591 = vlaneseq
          %vm592 = vcmp.ge.s32.totalorder %v591, 0
          %vm593 = vcmp.lt.s32.totalorder %v591, 256
          %vm594 = vmand %vm592, %vm593
          %595 = vst.msk [vmem:[#allocation2] sm:$0x3] %vm594, %v590
          %v596 = vld [vmem:[%s4] sm:$0x3]
          %v597 = vmul.f32 %v572, %v590
          %v598 = vsub.f32 %v596, %v597
          %599 = vst.msk [vmem:[#allocation3] sm:$0x3] %vm594, %v598
        $region80: #{mlp_forward.1} parent=63 // pred_fallthru
          _
        %p600 = scmp.eq.s32.totalorder %s27, 1
        // Predicated region
        $region81: #{mlp_forward.1} parent=63 // pred_check
          %p601 = pneg %p600
        $region82: #{mlp_forward.1} parent=63 // pred_check_branch
          %603 = sbr.rel (%p601) target = $region84
        $region83: #{mlp_forward.1} parent=63 // pred_region
          %v604 = vld [vmem:[#allocation2] sm:$0x3]
          %v606 = vperm.slane %v604, 0
          %v607 = vperm.slane %v604, 1
          %v610 = vmul.f32 %v475, %v606
          %v611 = vmul.f32 %v476, %v607
          %v612 = vmul.f32 %v477, %v606
          %v613 = vmul.f32 %v478, %v607
          %v614 = vld [vmem:[#allocation3] sm:$0x3]
          %v616 = vperm.slane %v614, 0
          %v617 = vperm.slane %v614, 1
          %v620 = vadd.f32 %v610, %v616
          %v621 = vadd.f32 %v611, %v617
          %v622 = vadd.f32 %v612, %v616
          %v623 = vadd.f32 %v613, %v617
          %v624 = vpack.c.bf16 %v622, %v620
          %v625 = vpack.c.bf16 %v623, %v621
          %v626 = vld [vmem:[#allocation6] sm:$0xff]
          %v627 = vld [vmem:[#allocation6 + $0x8] sm:$0xff]
          %v628 = vld [vmem:[#allocation6 + $0x10] sm:$0xff]
          %v629 = vld [vmem:[#allocation6 + $0x18] sm:$0xff]
          %v630 = vld [vmem:[#allocation6 + $0x20] sm:$0xff]
          %v631 = vld [vmem:[#allocation6 + $0x28] sm:$0xff]
          %v632 = vld [vmem:[#allocation6 + $0x30] sm:$0xff]
          %v633 = vld [vmem:[#allocation6 + $0x38] sm:$0xff]
          %v634 = vld [vmem:[#allocation6 + $0x40] sm:$0xff]
          %v635 = vld [vmem:[#allocation6 + $0x48] sm:$0xff]
          %v636 = vld [vmem:[#allocation6 + $0x50] sm:$0xff]
          %v637 = vld [vmem:[#allocation6 + $0x58] sm:$0xff]
          %v638 = vld [vmem:[#allocation6 + $0x60] sm:$0xff]
          %v639 = vld [vmem:[#allocation6 + $0x68] sm:$0xff]
          %v640 = vld [vmem:[#allocation6 + $0x70] sm:$0xff]
          %v641 = vld [vmem:[#allocation6 + $0x78] sm:$0xff]
          %v642 = vld [vmem:[#allocation6 + $0x80] sm:$0xff]
          %v643 = vld [vmem:[#allocation6 + $0x88] sm:$0xff]
          %v644 = vld [vmem:[#allocation6 + $0x90] sm:$0xff]
          %v645 = vld [vmem:[#allocation6 + $0x98] sm:$0xff]
          %v646 = vld [vmem:[#allocation6 + $0xa0] sm:$0xff]
          %v647 = vld [vmem:[#allocation6 + $0xa8] sm:$0xff]
          %v648 = vld [vmem:[#allocation6 + $0xb0] sm:$0xff]
          %v649 = vld [vmem:[#allocation6 + $0xb8] sm:$0xff]
          %v650 = vld [vmem:[#allocation6 + $0xc0] sm:$0xff]
          %v651 = vld [vmem:[#allocation6 + $0xc8] sm:$0xff]
          %v652 = vld [vmem:[#allocation6 + $0xd0] sm:$0xff]
          %v653 = vld [vmem:[#allocation6 + $0xd8] sm:$0xff]
          %v654 = vld [vmem:[#allocation6 + $0xe0] sm:$0xff]
          %v655 = vld [vmem:[#allocation6 + $0xe8] sm:$0xff]
          %v656 = vld [vmem:[#allocation6 + $0xf0] sm:$0xff]
          %v657 = vld [vmem:[#allocation6 + $0xf8] sm:$0xff]
          %v658 = vld [vmem:[%s6] sm:$0x3]
          %v660 = vperm.slane %v658, 0
          %v661 = vperm.slane %v658, 1
          %v696 = vunpack.c.l.b16 %v626
          %v697 = vunpack.c.h.b16 %v626
          %v698 = vunpack.c.l.b16 %v627
          %v699 = vunpack.c.h.b16 %v627
          %v700 = vunpack.c.l.b16 %v628
          %v701 = vunpack.c.h.b16 %v628
          %v702 = vunpack.c.l.b16 %v629
          %v703 = vunpack.c.h.b16 %v629
          %v704 = vunpack.c.l.b16 %v630
          %v705 = vunpack.c.h.b16 %v630
          %v706 = vunpack.c.l.b16 %v631
          %v707 = vunpack.c.h.b16 %v631
          %v708 = vunpack.c.l.b16 %v632
          %v709 = vunpack.c.h.b16 %v632
          %v710 = vunpack.c.l.b16 %v633
          %v711 = vunpack.c.h.b16 %v633
          %v712 = vunpack.c.l.b16 %v634
          %v713 = vunpack.c.h.b16 %v634
          %v714 = vunpack.c.l.b16 %v635
          %v715 = vunpack.c.h.b16 %v635
          %v716 = vunpack.c.l.b16 %v636
          %v717 = vunpack.c.h.b16 %v636
          %v718 = vunpack.c.l.b16 %v637
          %v719 = vunpack.c.h.b16 %v637
          %v720 = vunpack.c.l.b16 %v638
          %v721 = vunpack.c.h.b16 %v638
          %v722 = vunpack.c.l.b16 %v639
          %v723 = vunpack.c.h.b16 %v639
          %v724 = vunpack.c.l.b16 %v640
          %v725 = vunpack.c.h.b16 %v640
          %v726 = vunpack.c.l.b16 %v641
          %v727 = vunpack.c.h.b16 %v641
          %v728 = vunpack.c.l.b16 %v642
          %v729 = vunpack.c.h.b16 %v642
          %v730 = vunpack.c.l.b16 %v643
          %v731 = vunpack.c.h.b16 %v643
          %v732 = vunpack.c.l.b16 %v644
          %v733 = vunpack.c.h.b16 %v644
          %v734 = vunpack.c.l.b16 %v645
          %v735 = vunpack.c.h.b16 %v645
          %v736 = vunpack.c.l.b16 %v646
          %v737 = vunpack.c.h.b16 %v646
          %v738 = vunpack.c.l.b16 %v647
          %v739 = vunpack.c.h.b16 %v647
          %v740 = vunpack.c.l.b16 %v648
          %v741 = vunpack.c.h.b16 %v648
          %v742 = vunpack.c.l.b16 %v649
          %v743 = vunpack.c.h.b16 %v649
          %v744 = vunpack.c.l.b16 %v650
          %v745 = vunpack.c.h.b16 %v650
          %v746 = vunpack.c.l.b16 %v651
          %v747 = vunpack.c.h.b16 %v651
          %v748 = vunpack.c.l.b16 %v652
          %v749 = vunpack.c.h.b16 %v652
          %v750 = vunpack.c.l.b16 %v653
          %v751 = vunpack.c.h.b16 %v653
          %v752 = vunpack.c.l.b16 %v654
          %v753 = vunpack.c.h.b16 %v654
          %v754 = vunpack.c.l.b16 %v655
          %v755 = vunpack.c.h.b16 %v655
          %v756 = vunpack.c.l.b16 %v656
          %v757 = vunpack.c.h.b16 %v656
          %v758 = vunpack.c.l.b16 %v657
          %v759 = vunpack.c.h.b16 %v657
          %v760 = vpack.c.b16 %v698, %v696
          %v761 = vpack.c.b16 %v699, %v697
          %v762 = vpack.c.b16 %v702, %v700
          %v763 = vpack.c.b16 %v703, %v701
          %v764 = vpack.c.b16 %v706, %v704
          %v765 = vpack.c.b16 %v707, %v705
          %v766 = vpack.c.b16 %v710, %v708
          %v767 = vpack.c.b16 %v711, %v709
          %v768 = vpack.c.b16 %v714, %v712
          %v769 = vpack.c.b16 %v715, %v713
          %v770 = vpack.c.b16 %v718, %v716
          %v771 = vpack.c.b16 %v719, %v717
          %v772 = vpack.c.b16 %v722, %v720
          %v773 = vpack.c.b16 %v723, %v721
          %v774 = vpack.c.b16 %v726, %v724
          %v775 = vpack.c.b16 %v727, %v725
          %v776 = vpack.c.b16 %v730, %v728
          %v777 = vpack.c.b16 %v731, %v729
          %v778 = vpack.c.b16 %v734, %v732
          %v779 = vpack.c.b16 %v735, %v733
          %v780 = vpack.c.b16 %v738, %v736
          %v781 = vpack.c.b16 %v739, %v737
          %v782 = vpack.c.b16 %v742, %v740
          %v783 = vpack.c.b16 %v743, %v741
          %v784 = vpack.c.b16 %v746, %v744
          %v785 = vpack.c.b16 %v747, %v745
          %v786 = vpack.c.b16 %v750, %v748
          %v787 = vpack.c.b16 %v751, %v749
          %v788 = vpack.c.b16 %v754, %v752
          %v789 = vpack.c.b16 %v755, %v753
          %v790 = vpack.c.b16 %v758, %v756
          %v791 = vpack.c.b16 %v759, %v757
          %824 = vmatpush.bf16.msra.mxu0 %v774
          %825 = vmatpush.bf16.msra.mxu0 %v772
          %826 = vmatpush.bf16.msra.mxu0 %v770
          %827 = vmatpush.bf16.msra.mxu0 %v768
          %828 = vmatpush.bf16.msra.mxu0 %v766
          %829 = vmatpush.bf16.msra.mxu0 %v764
          %830 = vmatpush.bf16.msra.mxu0 %v762
          %831 = vmatpush.bf16.msra.mxu0 %v760
          %832 = vmatmul.bf16.gmra.mxu0 %v624
          %v833 = vpop.f32.mrf.mxu0
          %v834 = vadd.f32 %v660, %v833
          %v835 = vpop.f32.mrf.mxu0
          %v836 = vadd.f32 %v660, %v835
          %837 = vdwg.mxu0
          %838 = vmatpush.bf16.msra.mxu0 %v790
          %839 = vmatpush.bf16.msra.mxu0 %v788
          %840 = vmatpush.bf16.msra.mxu0 %v786
          %841 = vmatpush.bf16.msra.mxu0 %v784
          %842 = vmatpush.bf16.msra.mxu0 %v782
          %843 = vmatpush.bf16.msra.mxu0 %v780
          %844 = vmatpush.bf16.msra.mxu0 %v778
          %845 = vmatpush.bf16.msra.mxu0 %v776
          %846 = vmatmul.bf16.gmra.mxu0 %v625
          %v847 = vpop.f32.mrf.mxu0
          %v848 = vadd.f32 %v834, %v847
          %v849 = vpop.f32.mrf.mxu0
          %v850 = vadd.f32 %v836, %v849
          %851 = vdwg.mxu0
          %852 = vmatpush.bf16.msra.mxu0 %v775
          %853 = vmatpush.bf16.msra.mxu0 %v773
          %854 = vmatpush.bf16.msra.mxu0 %v771
          %855 = vmatpush.bf16.msra.mxu0 %v769
          %856 = vmatpush.bf16.msra.mxu0 %v767
          %857 = vmatpush.bf16.msra.mxu0 %v765
          %858 = vmatpush.bf16.msra.mxu0 %v763
          %859 = vmatpush.bf16.msra.mxu0 %v761
          %860 = vmatmul.bf16.gmra.mxu0 %v624
          %v861 = vpop.f32.mrf.mxu0
          %v862 = vadd.f32 %v661, %v861
          %v863 = vpop.f32.mrf.mxu0
          %v864 = vadd.f32 %v661, %v863
          %865 = vdwg.mxu0
          %866 = vmatpush.bf16.msra.mxu0 %v791
          %867 = vmatpush.bf16.msra.mxu0 %v789
          %868 = vmatpush.bf16.msra.mxu0 %v787
          %869 = vmatpush.bf16.msra.mxu0 %v785
          %870 = vmatpush.bf16.msra.mxu0 %v783
          %871 = vmatpush.bf16.msra.mxu0 %v781
          %872 = vmatpush.bf16.msra.mxu0 %v779
          %873 = vmatpush.bf16.msra.mxu0 %v777
          %874 = vmatmul.bf16.gmra.mxu0 %v625
          %v875 = vpop.f32.mrf.mxu0
          %v876 = vadd.f32 %v862, %v875
          %v877 = vpop.f32.mrf.mxu0
          %v878 = vadd.f32 %v864, %v877
          %879 = vdwg.mxu0
          %v880 = vmax.f32 %v848, 0.0
          %v881 = vmax.f32 %v876, 0.0
          %v882 = vmax.f32 %v850, 0.0
          %v883 = vmax.f32 %v878, 0.0
          %v884 = vmul.f32 %v880, %v490
          %v885 = vmul.f32 %v881, %v490
          %v886 = vmul.f32 %v882, %v491
          %v887 = vmul.f32 %v883, %v491
          %v888 = vld [vmem:[#allocation4] sm:$0x3]
          %v889 = vadd.f32 %v884, %v886
          %v890 = vrot.slane %v889, 4
          %v891 = vadd.f32 %v889, %v890
          %v892 = vrot.slane %v891, 2
          %v893 = vadd.f32 %v891, %v892
          %v894 = vrot.slane %v893, 1
          %v895 = vadd.f32 %v893, %v894
          %v896 = vadd.f32 %v885, %v887
          %v897 = vrot.slane %v896, 4
          %v898 = vadd.f32 %v896, %v897
          %v899 = vrot.slane %v898, 2
          %v900 = vadd.f32 %v898, %v899
          %v901 = vrot.slane %v900, 1
          %v902 = vadd.f32 %v900, %v901
          %v905 = vrot.slane %v902, 7
          %vm906 = vcmask 1040384
          %v907 = vsel %vm906, %v895, %v905
          %v909 = vadd.f32 %v888, %v907
          %v910 = vlaneseq
          %vm911 = vcmp.ge.s32.totalorder %v910, 0
          %vm912 = vcmp.lt.s32.totalorder %v910, 256
          %vm913 = vmand %vm911, %vm912
          %914 = vst.msk [vmem:[#allocation4] sm:$0x3] %vm913, %v909
          %v915 = vld [vmem:[#allocation5] sm:$0x3]
          %v916 = vmul.f32 %v884, %v884
          %v917 = vmul.f32 %v885, %v885
          %v918 = vmul.f32 %v886, %v886
          %v919 = vmul.f32 %v887, %v887
          %v920 = vadd.f32 %v916, %v918
          %v921 = vrot.slane %v920, 4
          %v922 = vadd.f32 %v920, %v921
          %v923 = vrot.slane %v922, 2
          %v924 = vadd.f32 %v922, %v923
          %v925 = vrot.slane %v924, 1
          %v926 = vadd.f32 %v924, %v925
          %v927 = vadd.f32 %v917, %v919
          %v928 = vrot.slane %v927, 4
          %v929 = vadd.f32 %v927, %v928
          %v930 = vrot.slane %v929, 2
          %v931 = vadd.f32 %v929, %v930
          %v932 = vrot.slane %v931, 1
          %v933 = vadd.f32 %v931, %v932
          %v936 = vrot.slane %v933, 7
          %v937 = vsel %vm906, %v926, %v936
          %v939 = vadd.f32 %v915, %v937
          %940 = vst.msk [vmem:[#allocation5] sm:$0x3] %vm913, %v939
        $region84: #{mlp_forward.1} parent=63 // pred_fallthru
          _
        %p941 = pnand %p600, %p566
        %p942 = pneg %p941
        // Predicated region
        $region85: #{mlp_forward.1} parent=63 // pred_check
          _
        $region86: #{mlp_forward.1} parent=63 // pred_check_branch
          %944 = sbr.rel (%p941) target = $region88
        $region87: #{mlp_forward.1} parent=63 // pred_region
          %v945 = vld [vmem:[#allocation4] sm:$0x3]
          %v946 = vmul.f32 %v945, 0.022727273
          %v947 = vld [vmem:[#allocation5] sm:$0x3]
          %v948 = vmul.f32 %v947, 0.022727273
          %v949 = vmul.f32 %v946, %v946
          %v950 = vsub.f32 %v948, %v949
          %v951 = vmax.f32 %v950, 0.0
          %v952 = vld [vmem:[%s7] sm:$0x3]
          %v953 = vadd.f32 %v951, 1e-05
          %v954 = vrsqrt.pop %v953
          %v955 = vmul.f32 %v954, %v953
          %v956 = vmul.f32 %v955, %v954
          %v957 = vmul.f32 0.5, %v956
          %v958 = vsub.f32 1.5, %v957
          %v959 = vmul.f32 %v954, %v958
          %vm960 = vweird.f32 %v953
          %vm961 = vweird.f32 %v954
          %vm962 = vmor %vm960, %vm961
          %v963 = vsel %vm962, %v954, %v959
          %v964 = vmul.f32 %v952, %v963
          %v965 = vlaneseq
          %vm966 = vcmp.ge.s32.totalorder %v965, 0
          %vm967 = vcmp.lt.s32.totalorder %v965, 256
          %vm968 = vmand %vm966, %vm967
          %969 = vst.msk [vmem:[#allocation4] sm:$0x3] %vm968, %v964
          %v970 = vld [vmem:[%s8] sm:$0x3]
          %v971 = vmul.f32 %v946, %v964
          %v972 = vsub.f32 %v970, %v971
          %973 = vst.msk [vmem:[#allocation5] sm:$0x3] %vm968, %v972
        $region88: #{mlp_forward.1} parent=63 // pred_fallthru
          _
        %p974 = scmp.eq.s32.totalorder %s27, 2
        // Predicated region
        $region89: #{mlp_forward.1} parent=63 // pred_check
          %p975 = pneg %p974
        $region90: #{mlp_forward.1} parent=63 // pred_check_branch
          %977 = sbr.rel (%p975) target = $region92
        $region91: #{mlp_forward.1} parent=63 // pred_region
          %v978 = vld [vmem:[#allocation2] sm:$0x3]
          %v980 = vperm.slane %v978, 0
          %v981 = vperm.slane %v978, 1
          %v984 = vmul.f32 %v475, %v980
          %v985 = vmul.f32 %v476, %v981
          %v986 = vmul.f32 %v477, %v980
          %v987 = vmul.f32 %v478, %v981
          %v988 = vld [vmem:[#allocation3] sm:$0x3]
          %v990 = vperm.slane %v988, 0
          %v991 = vperm.slane %v988, 1
          %v994 = vadd.f32 %v984, %v990
          %v995 = vadd.f32 %v985, %v991
          %v996 = vadd.f32 %v986, %v990
          %v997 = vadd.f32 %v987, %v991
          %v998 = vpack.c.bf16 %v996, %v994
          %v999 = vpack.c.bf16 %v997, %v995
          %v1000 = vld [vmem:[#allocation6] sm:$0xff]
          %v1001 = vld [vmem:[#allocation6 + $0x8] sm:$0xff]
          %v1002 = vld [vmem:[#allocation6 + $0x10] sm:$0xff]
          %v1003 = vld [vmem:[#allocation6 + $0x18] sm:$0xff]
          %v1004 = vld [vmem:[#allocation6 + $0x20] sm:$0xff]
          %v1005 = vld [vmem:[#allocation6 + $0x28] sm:$0xff]
          %v1006 = vld [vmem:[#allocation6 + $0x30] sm:$0xff]
          %v1007 = vld [vmem:[#allocation6 + $0x38] sm:$0xff]
          %v1008 = vld [vmem:[#allocation6 + $0x40] sm:$0xff]
          %v1009 = vld [vmem:[#allocation6 + $0x48] sm:$0xff]
          %v1010 = vld [vmem:[#allocation6 + $0x50] sm:$0xff]
          %v1011 = vld [vmem:[#allocation6 + $0x58] sm:$0xff]
          %v1012 = vld [vmem:[#allocation6 + $0x60] sm:$0xff]
          %v1013 = vld [vmem:[#allocation6 + $0x68] sm:$0xff]
          %v1014 = vld [vmem:[#allocation6 + $0x70] sm:$0xff]
          %v1015 = vld [vmem:[#allocation6 + $0x78] sm:$0xff]
          %v1016 = vld [vmem:[#allocation6 + $0x80] sm:$0xff]
          %v1017 = vld [vmem:[#allocation6 + $0x88] sm:$0xff]
          %v1018 = vld [vmem:[#allocation6 + $0x90] sm:$0xff]
          %v1019 = vld [vmem:[#allocation6 + $0x98] sm:$0xff]
          %v1020 = vld [vmem:[#allocation6 + $0xa0] sm:$0xff]
          %v1021 = vld [vmem:[#allocation6 + $0xa8] sm:$0xff]
          %v1022 = vld [vmem:[#allocation6 + $0xb0] sm:$0xff]
          %v1023 = vld [vmem:[#allocation6 + $0xb8] sm:$0xff]
          %v1024 = vld [vmem:[#allocation6 + $0xc0] sm:$0xff]
          %v1025 = vld [vmem:[#allocation6 + $0xc8] sm:$0xff]
          %v1026 = vld [vmem:[#allocation6 + $0xd0] sm:$0xff]
          %v1027 = vld [vmem:[#allocation6 + $0xd8] sm:$0xff]
          %v1028 = vld [vmem:[#allocation6 + $0xe0] sm:$0xff]
          %v1029 = vld [vmem:[#allocation6 + $0xe8] sm:$0xff]
          %v1030 = vld [vmem:[#allocation6 + $0xf0] sm:$0xff]
          %v1031 = vld [vmem:[#allocation6 + $0xf8] sm:$0xff]
          %v1032 = vld [vmem:[%s6] sm:$0x3]
          %v1034 = vperm.slane %v1032, 0
          %v1035 = vperm.slane %v1032, 1
          %v1070 = vunpack.c.l.b16 %v1000
          %v1071 = vunpack.c.h.b16 %v1000
          %v1072 = vunpack.c.l.b16 %v1001
          %v1073 = vunpack.c.h.b16 %v1001
          %v1074 = vunpack.c.l.b16 %v1002
          %v1075 = vunpack.c.h.b16 %v1002
          %v1076 = vunpack.c.l.b16 %v1003
          %v1077 = vunpack.c.h.b16 %v1003
          %v1078 = vunpack.c.l.b16 %v1004
          %v1079 = vunpack.c.h.b16 %v1004
          %v1080 = vunpack.c.l.b16 %v1005
          %v1081 = vunpack.c.h.b16 %v1005
          %v1082 = vunpack.c.l.b16 %v1006
          %v1083 = vunpack.c.h.b16 %v1006
          %v1084 = vunpack.c.l.b16 %v1007
          %v1085 = vunpack.c.h.b16 %v1007
          %v1086 = vunpack.c.l.b16 %v1008
          %v1087 = vunpack.c.h.b16 %v1008
          %v1088 = vunpack.c.l.b16 %v1009
          %v1089 = vunpack.c.h.b16 %v1009
          %v1090 = vunpack.c.l.b16 %v1010
          %v1091 = vunpack.c.h.b16 %v1010
          %v1092 = vunpack.c.l.b16 %v1011
          %v1093 = vunpack.c.h.b16 %v1011
          %v1094 = vunpack.c.l.b16 %v1012
          %v1095 = vunpack.c.h.b16 %v1012
          %v1096 = vunpack.c.l.b16 %v1013
          %v1097 = vunpack.c.h.b16 %v1013
          %v1098 = vunpack.c.l.b16 %v1014
          %v1099 = vunpack.c.h.b16 %v1014
          %v1100 = vunpack.c.l.b16 %v1015
          %v1101 = vunpack.c.h.b16 %v1015
          %v1102 = vunpack.c.l.b16 %v1016
          %v1103 = vunpack.c.h.b16 %v1016
          %v1104 = vunpack.c.l.b16 %v1017
          %v1105 = vunpack.c.h.b16 %v1017
          %v1106 = vunpack.c.l.b16 %v1018
          %v1107 = vunpack.c.h.b16 %v1018
          %v1108 = vunpack.c.l.b16 %v1019
          %v1109 = vunpack.c.h.b16 %v1019
          %v1110 = vunpack.c.l.b16 %v1020
          %v1111 = vunpack.c.h.b16 %v1020
          %v1112 = vunpack.c.l.b16 %v1021
          %v1113 = vunpack.c.h.b16 %v1021
          %v1114 = vunpack.c.l.b16 %v1022
          %v1115 = vunpack.c.h.b16 %v1022
          %v1116 = vunpack.c.l.b16 %v1023
          %v1117 = vunpack.c.h.b16 %v1023
          %v1118 = vunpack.c.l.b16 %v1024
          %v1119 = vunpack.c.h.b16 %v1024
          %v1120 = vunpack.c.l.b16 %v1025
          %v1121 = vunpack.c.h.b16 %v1025
          %v1122 = vunpack.c.l.b16 %v1026
          %v1123 = vunpack.c.h.b16 %v1026
          %v1124 = vunpack.c.l.b16 %v1027
          %v1125 = vunpack.c.h.b16 %v1027
          %v1126 = vunpack.c.l.b16 %v1028
          %v1127 = vunpack.c.h.b16 %v1028
          %v1128 = vunpack.c.l.b16 %v1029
          %v1129 = vunpack.c.h.b16 %v1029
          %v1130 = vunpack.c.l.b16 %v1030
          %v1131 = vunpack.c.h.b16 %v1030
          %v1132 = vunpack.c.l.b16 %v1031
          %v1133 = vunpack.c.h.b16 %v1031
          %v1134 = vpack.c.b16 %v1072, %v1070
          %v1135 = vpack.c.b16 %v1073, %v1071
          %v1136 = vpack.c.b16 %v1076, %v1074
          %v1137 = vpack.c.b16 %v1077, %v1075
          %v1138 = vpack.c.b16 %v1080, %v1078
          %v1139 = vpack.c.b16 %v1081, %v1079
          %v1140 = vpack.c.b16 %v1084, %v1082
          %v1141 = vpack.c.b16 %v1085, %v1083
          %v1142 = vpack.c.b16 %v1088, %v1086
          %v1143 = vpack.c.b16 %v1089, %v1087
          %v1144 = vpack.c.b16 %v1092, %v1090
          %v1145 = vpack.c.b16 %v1093, %v1091
          %v1146 = vpack.c.b16 %v1096, %v1094
          %v1147 = vpack.c.b16 %v1097, %v1095
          %v1148 = vpack.c.b16 %v1100, %v1098
          %v1149 = vpack.c.b16 %v1101, %v1099
          %v1150 = vpack.c.b16 %v1104, %v1102
          %v1151 = vpack.c.b16 %v1105, %v1103
          %v1152 = vpack.c.b16 %v1108, %v1106
          %v1153 = vpack.c.b16 %v1109, %v1107
          %v1154 = vpack.c.b16 %v1112, %v1110
          %v1155 = vpack.c.b16 %v1113, %v1111
          %v1156 = vpack.c.b16 %v1116, %v1114
          %v1157 = vpack.c.b16 %v1117, %v1115
          %v1158 = vpack.c.b16 %v1120, %v1118
          %v1159 = vpack.c.b16 %v1121, %v1119
          %v1160 = vpack.c.b16 %v1124, %v1122
          %v1161 = vpack.c.b16 %v1125, %v1123
          %v1162 = vpack.c.b16 %v1128, %v1126
          %v1163 = vpack.c.b16 %v1129, %v1127
          %v1164 = vpack.c.b16 %v1132, %v1130
          %v1165 = vpack.c.b16 %v1133, %v1131
          %1198 = vmatpush.bf16.msra.mxu0 %v1148
          %1199 = vmatpush.bf16.msra.mxu0 %v1146
          %1200 = vmatpush.bf16.msra.mxu0 %v1144
          %1201 = vmatpush.bf16.msra.mxu0 %v1142
          %1202 = vmatpush.bf16.msra.mxu0 %v1140
          %1203 = vmatpush.bf16.msra.mxu0 %v1138
          %1204 = vmatpush.bf16.msra.mxu0 %v1136
          %1205 = vmatpush.bf16.msra.mxu0 %v1134
          %1206 = vmatmul.bf16.gmra.mxu0 %v998
          %v1207 = vpop.f32.mrf.mxu0
          %v1208 = vadd.f32 %v1034, %v1207
          %v1209 = vpop.f32.mrf.mxu0
          %v1210 = vadd.f32 %v1034, %v1209
          %1211 = vdwg.mxu0
          %1212 = vmatpush.bf16.msra.mxu0 %v1164
          %1213 = vmatpush.bf16.msra.mxu0 %v1162
          %1214 = vmatpush.bf16.msra.mxu0 %v1160
          %1215 = vmatpush.bf16.msra.mxu0 %v1158
          %1216 = vmatpush.bf16.msra.mxu0 %v1156
          %1217 = vmatpush.bf16.msra.mxu0 %v1154
          %1218 = vmatpush.bf16.msra.mxu0 %v1152
          %1219 = vmatpush.bf16.msra.mxu0 %v1150
          %1220 = vmatmul.bf16.gmra.mxu0 %v999
          %v1221 = vpop.f32.mrf.mxu0
          %v1222 = vadd.f32 %v1208, %v1221
          %v1223 = vpop.f32.mrf.mxu0
          %v1224 = vadd.f32 %v1210, %v1223
          %1225 = vdwg.mxu0
          %1226 = vmatpush.bf16.msra.mxu0 %v1149
          %1227 = vmatpush.bf16.msra.mxu0 %v1147
          %1228 = vmatpush.bf16.msra.mxu0 %v1145
          %1229 = vmatpush.bf16.msra.mxu0 %v1143
          %1230 = vmatpush.bf16.msra.mxu0 %v1141
          %1231 = vmatpush.bf16.msra.mxu0 %v1139
          %1232 = vmatpush.bf16.msra.mxu0 %v1137
          %1233 = vmatpush.bf16.msra.mxu0 %v1135
          %1234 = vmatmul.bf16.gmra.mxu0 %v998
          %v1235 = vpop.f32.mrf.mxu0
          %v1236 = vadd.f32 %v1035, %v1235
          %v1237 = vpop.f32.mrf.mxu0
          %v1238 = vadd.f32 %v1035, %v1237
          %1239 = vdwg.mxu0
          %1240 = vmatpush.bf16.msra.mxu0 %v1165
          %1241 = vmatpush.bf16.msra.mxu0 %v1163
          %1242 = vmatpush.bf16.msra.mxu0 %v1161
          %1243 = vmatpush.bf16.msra.mxu0 %v1159
          %1244 = vmatpush.bf16.msra.mxu0 %v1157
          %1245 = vmatpush.bf16.msra.mxu0 %v1155
          %1246 = vmatpush.bf16.msra.mxu0 %v1153
          %1247 = vmatpush.bf16.msra.mxu0 %v1151
          %1248 = vmatmul.bf16.gmra.mxu0 %v999
          %v1249 = vpop.f32.mrf.mxu0
          %v1250 = vadd.f32 %v1236, %v1249
          %v1251 = vpop.f32.mrf.mxu0
          %v1252 = vadd.f32 %v1238, %v1251
          %1253 = vdwg.mxu0
          %v1254 = vmax.f32 %v1222, 0.0
          %v1255 = vmax.f32 %v1250, 0.0
          %v1256 = vmax.f32 %v1224, 0.0
          %v1257 = vmax.f32 %v1252, 0.0
          %v1258 = vld [vmem:[#allocation4] sm:$0x3]
          %v1260 = vperm.slane %v1258, 0
          %v1261 = vperm.slane %v1258, 1
          %v1264 = vmul.f32 %v1254, %v1260
          %v1265 = vmul.f32 %v1255, %v1261
          %v1266 = vmul.f32 %v1256, %v1260
          %v1267 = vmul.f32 %v1257, %v1261
          %v1268 = vld [vmem:[#allocation5] sm:$0x3]
          %v1270 = vperm.slane %v1268, 0
          %v1271 = vperm.slane %v1268, 1
          %v1274 = vadd.f32 %v1264, %v1270
          %v1275 = vadd.f32 %v1265, %v1271
          %v1276 = vadd.f32 %v1266, %v1270
          %v1277 = vadd.f32 %v1267, %v1271
          %v1278 = vpack.c.bf16 %v1276, %v1274
          %v1279 = vpack.c.bf16 %v1277, %v1275
          %v1280 = vld [vmem:[%s9] sm:$0xf]
          %v1281 = vld [vmem:[%s9 + $0x4] sm:$0xf]
          %v1282 = vld [vmem:[%s9 + $0x8] sm:$0xf]
          %v1283 = vld [vmem:[%s9 + $0xc] sm:$0xf]
          %v1284 = vld [vmem:[%s9 + $0x10] sm:$0xf]
          %v1285 = vld [vmem:[%s9 + $0x14] sm:$0xf]
          %v1286 = vld [vmem:[%s9 + $0x18] sm:$0xf]
          %v1287 = vld [vmem:[%s9 + $0x1c] sm:$0xf]
          %v1288 = vld [vmem:[%s9 + $0x20] sm:$0xf]
          %v1289 = vld [vmem:[%s9 + $0x24] sm:$0xf]
          %v1290 = vld [vmem:[%s9 + $0x28] sm:$0xf]
          %v1291 = vld [vmem:[%s9 + $0x2c] sm:$0xf]
          %v1292 = vld [vmem:[%s9 + $0x30] sm:$0xf]
          %v1293 = vld [vmem:[%s9 + $0x34] sm:$0xf]
          %v1294 = vld [vmem:[%s9 + $0x38] sm:$0xf]
          %v1295 = vld [vmem:[%s9 + $0x3c] sm:$0xf]
          %v1296 = vld [vmem:[%s9 + $0x40] sm:$0xf]
          %v1297 = vld [vmem:[%s9 + $0x44] sm:$0xf]
          %v1298 = vld [vmem:[%s9 + $0x48] sm:$0xf]
          %v1299 = vld [vmem:[%s9 + $0x4c] sm:$0xf]
          %v1300 = vld [vmem:[%s9 + $0x50] sm:$0xf]
          %v1301 = vld [vmem:[%s9 + $0x54] sm:$0xf]
          %v1302 = vld [vmem:[%s9 + $0x58] sm:$0xf]
          %v1303 = vld [vmem:[%s9 + $0x5c] sm:$0xf]
          %v1304 = vld [vmem:[%s9 + $0x60] sm:$0xf]
          %v1305 = vld [vmem:[%s9 + $0x64] sm:$0xf]
          %v1306 = vld [vmem:[%s9 + $0x68] sm:$0xf]
          %v1307 = vld [vmem:[%s9 + $0x6c] sm:$0xf]
          %v1308 = vld [vmem:[%s9 + $0x70] sm:$0xf]
          %v1309 = vld [vmem:[%s9 + $0x74] sm:$0xf]
          %v1310 = vld [vmem:[%s9 + $0x78] sm:$0xf]
          %v1311 = vld [vmem:[%s9 + $0x7c] sm:$0xf]
          %v1344 = vunpack.c.l.b16 %v1280
          %v1345 = vunpack.c.l.b16 %v1281
          %v1346 = vunpack.c.l.b16 %v1282
          %v1347 = vunpack.c.l.b16 %v1283
          %v1348 = vunpack.c.l.b16 %v1284
          %v1349 = vunpack.c.l.b16 %v1285
          %v1350 = vunpack.c.l.b16 %v1286
          %v1351 = vunpack.c.l.b16 %v1287
          %v1352 = vunpack.c.l.b16 %v1288
          %v1353 = vunpack.c.l.b16 %v1289
          %v1354 = vunpack.c.l.b16 %v1290
          %v1355 = vunpack.c.l.b16 %v1291
          %v1356 = vunpack.c.l.b16 %v1292
          %v1357 = vunpack.c.l.b16 %v1293
          %v1358 = vunpack.c.l.b16 %v1294
          %v1359 = vunpack.c.l.b16 %v1295
          %v1360 = vunpack.c.l.b16 %v1296
          %v1361 = vunpack.c.l.b16 %v1297
          %v1362 = vunpack.c.l.b16 %v1298
          %v1363 = vunpack.c.l.b16 %v1299
          %v1364 = vunpack.c.l.b16 %v1300
          %v1365 = vunpack.c.l.b16 %v1301
          %v1366 = vunpack.c.l.b16 %v1302
          %v1367 = vunpack.c.l.b16 %v1303
          %v1368 = vunpack.c.l.b16 %v1304
          %v1369 = vunpack.c.l.b16 %v1305
          %v1370 = vunpack.c.l.b16 %v1306
          %v1371 = vunpack.c.l.b16 %v1307
          %v1372 = vunpack.c.l.b16 %v1308
          %v1373 = vunpack.c.l.b16 %v1309
          %v1374 = vunpack.c.l.b16 %v1310
          %v1375 = vunpack.c.l.b16 %v1311
          %v1376 = vpack.c.b16 %v1345, %v1344
          %v1377 = vpack.c.b16 %v1347, %v1346
          %v1378 = vpack.c.b16 %v1349, %v1348
          %v1379 = vpack.c.b16 %v1351, %v1350
          %v1380 = vpack.c.b16 %v1353, %v1352
          %v1381 = vpack.c.b16 %v1355, %v1354
          %v1382 = vpack.c.b16 %v1357, %v1356
          %v1383 = vpack.c.b16 %v1359, %v1358
          %v1384 = vpack.c.b16 %v1361, %v1360
          %v1385 = vpack.c.b16 %v1363, %v1362
          %v1386 = vpack.c.b16 %v1365, %v1364
          %v1387 = vpack.c.b16 %v1367, %v1366
          %v1388 = vpack.c.b16 %v1369, %v1368
          %v1389 = vpack.c.b16 %v1371, %v1370
          %v1390 = vpack.c.b16 %v1373, %v1372
          %v1391 = vpack.c.b16 %v1375, %v1374
          %1408 = vmatpush.bf16.msra.mxu0 %v1383
          %1409 = vmatpush.bf16.msra.mxu0 %v1382
          %1410 = vmatpush.bf16.msra.mxu0 %v1381
          %1411 = vmatpush.bf16.msra.mxu0 %v1380
          %1412 = vmatpush.bf16.msra.mxu0 %v1379
          %1413 = vmatpush.bf16.msra.mxu0 %v1378
          %1414 = vmatpush.bf16.msra.mxu0 %v1377
          %1415 = vmatpush.bf16.msra.mxu0 %v1376
          %1416 = vmatmul.bf16.gmra.mxu0 %v1278
          %v1417 = vpop.f32.mrf.mxu0
          %v1418 = vadd.f32 0.0, %v1417
          %v1419 = vpop.f32.mrf.mxu0
          %v1420 = vadd.f32 0.0, %v1419
          %1421 = vdwg.mxu0
          %1422 = vmatpush.bf16.msra.mxu0 %v1391
          %1423 = vmatpush.bf16.msra.mxu0 %v1390
          %1424 = vmatpush.bf16.msra.mxu0 %v1389
          %1425 = vmatpush.bf16.msra.mxu0 %v1388
          %1426 = vmatpush.bf16.msra.mxu0 %v1387
          %1427 = vmatpush.bf16.msra.mxu0 %v1386
          %1428 = vmatpush.bf16.msra.mxu0 %v1385
          %1429 = vmatpush.bf16.msra.mxu0 %v1384
          %1430 = vmatmul.bf16.gmra.mxu0 %v1279
          %v1431 = vpop.f32.mrf.mxu0
          %v1432 = vadd.f32 %v1418, %v1431
          %v1433 = vpop.f32.mrf.mxu0
          %v1434 = vadd.f32 %v1420, %v1433
          %1435 = vdwg.mxu0
          %v1436 = vld [vmem:[%s10] sm:$0x1]
          %v1438 = vperm.slane %v1436, 0
          %v1440 = vadd.f32 %v1432, %v1438
          %v1441 = vadd.f32 %v1434, %v1438
          %vm1442 = vcmask 23552
          %1443 = vst.msk [vmem:[%s417] sm:$0xff] %vm1442, %v1440
          %1444 = vst.msk [vmem:[%s417 + $0x8] sm:$0xff] %vm1442, %v1441
        $region92: #{mlp_forward.1} parent=63 // pred_fallthru
          _
        %s1445 = smul.u32 2, %s28
        %p1446 = scmp.lt.s32.totalorder %s1445, 5
        %s1447 = scalar_select %p1446, %s1445, 5
        %s1448 = smul.addr %s1447, 8
        %s1449 = scalar_lea.vmem %s11, %s1448
        // Predicated region
        $region93: #{mlp_forward.1} parent=63 // pred_check
          %p1450 = pneg %p289
        $region94: #{mlp_forward.1} parent=63 // pred_check_branch
          %1452 = sbr.rel (%p1450) target = $region96
        $region95: #{mlp_forward.1} parent=63 // pred_region
          %s1453 = smul.u32 2, %s28
        $region96: #{mlp_forward.1} parent=63 // pred_fallthru
          _
      $region64: #{mlp_forward.1} parent=5 // pred_fallthru
        _
      %p1454 = scmp.le.s32.totalorder 2, %s18
      // Predicated region
      $region97: #{mlp_forward.1} parent=5 // pred_check
        %p1455 = pneg %p1454
      $region98: #{mlp_forward.1} parent=5 // pred_check_branch
        %1457 = sbr.rel (%p1455) target = $region100
      $region99: #{mlp_forward.1} parent=5 // pred_region
        %s1458 = ssub.s32 %s18, 2
        // Predicated region
        $region101: #{mlp_forward.1} parent=99 // pred_check
          %p1459 = pneg %p295
        $region102: #{mlp_forward.1} parent=99 // pred_check_branch
          %1461 = sbr.rel (%p1459) target = $region104
        $region103: #{mlp_forward.1} parent=99 // pred_region
          %s1462 = smul.u32 2, %s30
          %p1463 = scmp.lt.s32.totalorder %s1462, 5
          %s1464 = scalar_select %p1463, %s1462, 5
          %s1465 = smul.addr %s1464, 8
          %s1466 = scalar_lea.vmem %s11, %s1465
        $region104: #{mlp_forward.1} parent=99 // pred_fallthru
          _
      $region100: #{mlp_forward.1} parent=5 // pred_fallthru
        _
    $region6: #{mlp_forward.1} parent=1 // loop_footer
      %s22 = sadd.s32 1, %s18
    $region7: #{mlp_forward.1} parent=1 // loop_footer_branch
      %17 = sbr.rel target = $region3
    $region8: #{mlp_forward.1} parent=1 // loop_exit
      _
    %1467 = vsyncpa [#allocation7], 1
    %s1468 = scalar_lea.sflag [#allocation7], 1
    %1469 = vsyncpa %s1468, 1

</llo_original>
